<compile_context>
chip_gen: v6e
topology: v6e:2x2x1
jax: 0.10.0
libtpu: 0.0.40
codegen_flags: <defaults>
</compile_context>

<pallas_src>
import functools

import jax
import jax.numpy as jnp
from jax import lax
from jax.experimental import pallas as pl
from jax.experimental.pallas import tpu as pltpu

# ----- model hyperparameters (small, synthetic) -----
VOCAB_SIZE = 32
EMBED_DIM = 16
HIDDEN = 32
NUM_CLASSES = 4
BATCH = 2
SEQ = 8

BATCH_PAD = 8     # pad batch to a full 8-sublane tile
CLASS_PAD = 128   # lane-dense output width (sliced back to NUM_CLASSES outside)


def lstm_fc_kernel(ids_ref, fused_ref, whh_ref, wfc_ref, bfc_ref, out_ref,
                   *, seq_len, batch, batch_pad, hidden, vocab):
    """Embedding-lookup (fused with input projection) + LSTM + FC, one program.

    ids_ref   : SMEM (B, T) int32   token ids
    fused_ref : VMEM (V, 4H) f32    emb @ w_ih.T + (b_ih + b_hh)
    whh_ref   : VMEM (H, 4H) f32    hidden->gates weights (transposed)
    wfc_ref   : VMEM (H, Cp) f32    fc weight, transposed + lane-padded to 128
    bfc_ref   : VMEM (1, Cp) f32    fc bias, lane-padded to 128
    out_ref   : VMEM (Bp, Cp) f32   padded logits
    """
    T, B, Bp, H, V = seq_len, batch, batch_pad, hidden, vocab

    # ---- in-kernel embedding gather via one-hot selector + one MXU matmul ----
    # Row r = t*Bp + b of `sel` is one-hot at token_ids[b, t]; padded batch
    # rows stay all-zero (token "-1" never matches), so their gates_in is 0.
    rows = lax.broadcasted_iota(jnp.int32, (T * Bp, V), 0)
    cols = lax.broadcasted_iota(jnp.int32, (T * Bp, V), 1)
    toks = jnp.full((T * Bp, V), -1, dtype=jnp.int32)
    for t in range(T):
        for b in range(B):
            toks = jnp.where(rows == t * Bp + b, ids_ref[b, t], toks)
    sel = (cols == toks).astype(jnp.float32)                        # (T*Bp, V)

    # All timesteps' (already biased) input gates in one prologue matmul;
    # (T*Bp, 4H) = 8 vregs, kept as an SSA value (no scratch round trip).
    gates_in = jnp.dot(sel, fused_ref[...],
                       preferred_element_type=jnp.float32)          # (T*Bp, 4H)

    # Resident bf16 copy of Whh for the latency-bound recurrence.
    whh = whh_ref[...].astype(jnp.bfloat16)                         # (H, 4H)

    h = jnp.zeros((Bp, H), jnp.float32)
    c = jnp.zeros((Bp, H), jnp.float32)
    # Fully unrolled time loop; all slices below are static.
    for t in range(T):
        g_in = gates_in[t * Bp:(t + 1) * Bp, :]                     # (Bp, 4H)
        gates = jnp.dot(h.astype(jnp.bfloat16), whh,
                        preferred_element_type=jnp.float32) + g_in
        # full-width transcendentals, then static slices (gate order i, f, g, o)
        sig = jax.nn.sigmoid(gates)
        tnh = jnp.tanh(gates)
        i_g = sig[:, 0:H]
        f_g = sig[:, H:2 * H]
        g_g = tnh[:, 2 * H:3 * H]
        o_g = sig[:, 3 * H:4 * H]
        c = f_g * c + i_g * g_g
        h = o_g * jnp.tanh(c)

    # final FC on the last hidden state; lane-dense (Bp, 128) unmasked store
    out_ref[...] = (jnp.dot(h, wfc_ref[...], preferred_element_type=jnp.float32)
                    + bfc_ref[...])


def prepare_params(params):
    """One-time parameter prep (fold embedding into the input projection)."""
    fused_table = (params["embedding"] @ params["w_ih"].T
                   + (params["b_ih"] + params["b_hh"]))              # (V, 4H)
    wfc_t = jnp.pad(params["w_fc"].T,
                    ((0, 0), (0, CLASS_PAD - NUM_CLASSES)))          # (H, 128)
    bfc = jnp.pad(params["b_fc"],
                  (0, CLASS_PAD - NUM_CLASSES)).reshape(1, -1)       # (1, 128)
    return {
        "fused_table": fused_table.astype(jnp.float32),
        "whh_t": params["w_hh"].T.astype(jnp.float32),               # (H, 4H)
        "wfc_t": wfc_t.astype(jnp.float32),
        "bfc": bfc.astype(jnp.float32),
    }


def author_classifier_forward(token_ids, prep):
    """token_ids: (B, T) int32.  Returns (B, NUM_CLASSES) float32 logits."""
    B, T = token_ids.shape
    assert B <= BATCH_PAD
    H = prep["whh_t"].shape[0]
    V = prep["fused_table"].shape[0]

    kernel = functools.partial(
        lstm_fc_kernel, seq_len=T, batch=B, batch_pad=BATCH_PAD,
        hidden=H, vocab=V)

    smem = pl.BlockSpec(memory_space=pltpu.MemorySpace.SMEM)
    vmem = pl.BlockSpec(memory_space=pltpu.MemorySpace.VMEM)

    out_pad = pl.pallas_call(
        kernel,
        out_shape=jax.ShapeDtypeStruct((BATCH_PAD, CLASS_PAD), jnp.float32),
        in_specs=[smem, vmem, vmem, vmem, vmem],
        out_specs=vmem,
    )(token_ids.astype(jnp.int32), prep["fused_table"], prep["whh_t"],
      prep["wfc_t"], prep["bfc"])

    return out_pad[:B, :NUM_CLASSES]


def init_params(key):
    ks = jax.random.split(key, 7)
    scale = 0.1
    return {
        "embedding": scale * jax.random.normal(ks[0], (VOCAB_SIZE, EMBED_DIM), jnp.float32),
        "w_ih": scale * jax.random.normal(ks[1], (4 * HIDDEN, EMBED_DIM), jnp.float32),
        "w_hh": scale * jax.random.normal(ks[2], (4 * HIDDEN, HIDDEN), jnp.float32),
        "b_ih": scale * jax.random.normal(ks[3], (4 * HIDDEN,), jnp.float32),
        "b_hh": scale * jax.random.normal(ks[4], (4 * HIDDEN,), jnp.float32),
        "w_fc": scale * jax.random.normal(ks[5], (NUM_CLASSES, HIDDEN), jnp.float32),
        "b_fc": scale * jax.random.normal(ks[6], (NUM_CLASSES,), jnp.float32),
    }


def reference_forward(token_ids, params):
    """Pure-JAX f32 reference mirroring PyTorch LSTM semantics (gate order i,f,g,o)."""
    emb = params["embedding"][token_ids]  # (B, T, E)
    B, T, E = emb.shape
    H = HIDDEN
    h = jnp.zeros((B, H), jnp.float32)
    c = jnp.zeros((B, H), jnp.float32)
    for t in range(T):
        gates = emb[:, t, :] @ params["w_ih"].T + params["b_ih"] \
              + h @ params["w_hh"].T + params["b_hh"]
        i = jax.nn.sigmoid(gates[:, 0:H])
        f = jax.nn.sigmoid(gates[:, H:2 * H])
        g = jnp.tanh(gates[:, 2 * H:3 * H])
        o = jax.nn.sigmoid(gates[:, 3 * H:4 * H])
        c = f * c + i * g
        h = o * jnp.tanh(c)
    return h @ params["w_fc"].T + params["b_fc"]


if __name__ == "__main__":
    key = jax.random.PRNGKey(0)
    pkey, xkey = jax.random.split(key)
    params = init_params(pkey)
    token_ids = jax.random.randint(xkey, (BATCH, SEQ), 0, VOCAB_SIZE, dtype=jnp.int32)

    prep = prepare_params(params)
    out = author_classifier_forward(token_ids, prep)
    out = jax.block_until_ready(out)

    ref = reference_forward(token_ids, params)
    assert out.shape == (BATCH, NUM_CLASSES)
    # Tolerance relaxed vs. pure f32 because the recurrent h@Whh matmul is fed
    # in bf16 (f32 accumulation); gate math and FC remain f32.
    assert jnp.allclose(out, ref, atol=5e-3, rtol=5e-3), "mismatch vs reference"

    print("KERNEL_OK")
</pallas_src>

<mosaic_0001>
module attributes {stable_mosaic.version = 11 : i64} {
  func.func @lstm_fc_kernel(%arg0: memref<2x8xi32, #tpu.memory_space<smem>>, %arg1: memref<32x128xf32, #tpu.memory_space<vmem>>, %arg2: memref<32x128xf32, #tpu.memory_space<vmem>>, %arg3: memref<32x128xf32, #tpu.memory_space<vmem>>, %arg4: memref<1x128xf32, #tpu.memory_space<vmem>>, %arg5: memref<8x128xf32, #tpu.memory_space<vmem>>) attributes {dimension_semantics = [], scalar_prefetch = 0 : i64, scratch_operands = 0 : i64, tpu.core_type = #tpu.core_type<tc>} {
    %0 = tpu.iota {dimensions = array<i32: 0>} : vector<64x32xi32>
    %1 = tpu.iota {dimensions = array<i32: 1>} : vector<64x32xi32>
    %c-1_i32 = arith.constant -1 : i32
    %2 = vector.broadcast %c-1_i32 : i32 to vector<64x32xi32>
    %c0_i32 = arith.constant 0 : i32
    %3 = vector.broadcast %c0_i32 : i32 to vector<64x32xi32>
    %4 = arith.cmpi eq, %0, %3 : vector<64x32xi32>
    %c0 = arith.constant 0 : index
    %c0_0 = arith.constant 0 : index
    %5 = memref.load %arg0[%c0, %c0_0] : memref<2x8xi32, #tpu.memory_space<smem>>
    %6 = vector.broadcast %5 : i32 to vector<64x32xi32>
    %7 = arith.select %4, %6, %2 : vector<64x32xi1>, vector<64x32xi32>
    %c1_i32 = arith.constant 1 : i32
    %8 = vector.broadcast %c1_i32 : i32 to vector<64x32xi32>
    %9 = arith.cmpi eq, %0, %8 : vector<64x32xi32>
    %c1 = arith.constant 1 : index
    %c0_1 = arith.constant 0 : index
    %10 = memref.load %arg0[%c1, %c0_1] : memref<2x8xi32, #tpu.memory_space<smem>>
    %11 = vector.broadcast %10 : i32 to vector<64x32xi32>
    %12 = arith.select %9, %11, %7 : vector<64x32xi1>, vector<64x32xi32>
    %c8_i32 = arith.constant 8 : i32
    %13 = vector.broadcast %c8_i32 : i32 to vector<64x32xi32>
    %14 = arith.cmpi eq, %0, %13 : vector<64x32xi32>
    %c0_2 = arith.constant 0 : index
    %c1_3 = arith.constant 1 : index
    %15 = memref.load %arg0[%c0_2, %c1_3] : memref<2x8xi32, #tpu.memory_space<smem>>
    %16 = vector.broadcast %15 : i32 to vector<64x32xi32>
    %17 = arith.select %14, %16, %12 : vector<64x32xi1>, vector<64x32xi32>
    %c9_i32 = arith.constant 9 : i32
    %18 = vector.broadcast %c9_i32 : i32 to vector<64x32xi32>
    %19 = arith.cmpi eq, %0, %18 : vector<64x32xi32>
    %c1_4 = arith.constant 1 : index
    %c1_5 = arith.constant 1 : index
    %20 = memref.load %arg0[%c1_4, %c1_5] : memref<2x8xi32, #tpu.memory_space<smem>>
    %21 = vector.broadcast %20 : i32 to vector<64x32xi32>
    %22 = arith.select %19, %21, %17 : vector<64x32xi1>, vector<64x32xi32>
    %c16_i32 = arith.constant 16 : i32
    %23 = vector.broadcast %c16_i32 : i32 to vector<64x32xi32>
    %24 = arith.cmpi eq, %0, %23 : vector<64x32xi32>
    %c0_6 = arith.constant 0 : index
    %c2 = arith.constant 2 : index
    %25 = memref.load %arg0[%c0_6, %c2] : memref<2x8xi32, #tpu.memory_space<smem>>
    %26 = vector.broadcast %25 : i32 to vector<64x32xi32>
    %27 = arith.select %24, %26, %22 : vector<64x32xi1>, vector<64x32xi32>
    %c17_i32 = arith.constant 17 : i32
    %28 = vector.broadcast %c17_i32 : i32 to vector<64x32xi32>
    %29 = arith.cmpi eq, %0, %28 : vector<64x32xi32>
    %c1_7 = arith.constant 1 : index
    %c2_8 = arith.constant 2 : index
    %30 = memref.load %arg0[%c1_7, %c2_8] : memref<2x8xi32, #tpu.memory_space<smem>>
    %31 = vector.broadcast %30 : i32 to vector<64x32xi32>
    %32 = arith.select %29, %31, %27 : vector<64x32xi1>, vector<64x32xi32>
    %c24_i32 = arith.constant 24 : i32
    %33 = vector.broadcast %c24_i32 : i32 to vector<64x32xi32>
    %34 = arith.cmpi eq, %0, %33 : vector<64x32xi32>
    %c0_9 = arith.constant 0 : index
    %c3 = arith.constant 3 : index
    %35 = memref.load %arg0[%c0_9, %c3] : memref<2x8xi32, #tpu.memory_space<smem>>
    %36 = vector.broadcast %35 : i32 to vector<64x32xi32>
    %37 = arith.select %34, %36, %32 : vector<64x32xi1>, vector<64x32xi32>
    %c25_i32 = arith.constant 25 : i32
    %38 = vector.broadcast %c25_i32 : i32 to vector<64x32xi32>
    %39 = arith.cmpi eq, %0, %38 : vector<64x32xi32>
    %c1_10 = arith.constant 1 : index
    %c3_11 = arith.constant 3 : index
    %40 = memref.load %arg0[%c1_10, %c3_11] : memref<2x8xi32, #tpu.memory_space<smem>>
    %41 = vector.broadcast %40 : i32 to vector<64x32xi32>
    %42 = arith.select %39, %41, %37 : vector<64x32xi1>, vector<64x32xi32>
    %c32_i32 = arith.constant 32 : i32
    %43 = vector.broadcast %c32_i32 : i32 to vector<64x32xi32>
    %44 = arith.cmpi eq, %0, %43 : vector<64x32xi32>
    %c0_12 = arith.constant 0 : index
    %c4 = arith.constant 4 : index
    %45 = memref.load %arg0[%c0_12, %c4] : memref<2x8xi32, #tpu.memory_space<smem>>
    %46 = vector.broadcast %45 : i32 to vector<64x32xi32>
    %47 = arith.select %44, %46, %42 : vector<64x32xi1>, vector<64x32xi32>
    %c33_i32 = arith.constant 33 : i32
    %48 = vector.broadcast %c33_i32 : i32 to vector<64x32xi32>
    %49 = arith.cmpi eq, %0, %48 : vector<64x32xi32>
    %c1_13 = arith.constant 1 : index
    %c4_14 = arith.constant 4 : index
    %50 = memref.load %arg0[%c1_13, %c4_14] : memref<2x8xi32, #tpu.memory_space<smem>>
    %51 = vector.broadcast %50 : i32 to vector<64x32xi32>
    %52 = arith.select %49, %51, %47 : vector<64x32xi1>, vector<64x32xi32>
    %c40_i32 = arith.constant 40 : i32
    %53 = vector.broadcast %c40_i32 : i32 to vector<64x32xi32>
    %54 = arith.cmpi eq, %0, %53 : vector<64x32xi32>
    %c0_15 = arith.constant 0 : index
    %c5 = arith.constant 5 : index
    %55 = memref.load %arg0[%c0_15, %c5] : memref<2x8xi32, #tpu.memory_space<smem>>
    %56 = vector.broadcast %55 : i32 to vector<64x32xi32>
    %57 = arith.select %54, %56, %52 : vector<64x32xi1>, vector<64x32xi32>
    %c41_i32 = arith.constant 41 : i32
    %58 = vector.broadcast %c41_i32 : i32 to vector<64x32xi32>
    %59 = arith.cmpi eq, %0, %58 : vector<64x32xi32>
    %c1_16 = arith.constant 1 : index
    %c5_17 = arith.constant 5 : index
    %60 = memref.load %arg0[%c1_16, %c5_17] : memref<2x8xi32, #tpu.memory_space<smem>>
    %61 = vector.broadcast %60 : i32 to vector<64x32xi32>
    %62 = arith.select %59, %61, %57 : vector<64x32xi1>, vector<64x32xi32>
    %c48_i32 = arith.constant 48 : i32
    %63 = vector.broadcast %c48_i32 : i32 to vector<64x32xi32>
    %64 = arith.cmpi eq, %0, %63 : vector<64x32xi32>
    %c0_18 = arith.constant 0 : index
    %c6 = arith.constant 6 : index
    %65 = memref.load %arg0[%c0_18, %c6] : memref<2x8xi32, #tpu.memory_space<smem>>
    %66 = vector.broadcast %65 : i32 to vector<64x32xi32>
    %67 = arith.select %64, %66, %62 : vector<64x32xi1>, vector<64x32xi32>
    %c49_i32 = arith.constant 49 : i32
    %68 = vector.broadcast %c49_i32 : i32 to vector<64x32xi32>
    %69 = arith.cmpi eq, %0, %68 : vector<64x32xi32>
    %c1_19 = arith.constant 1 : index
    %c6_20 = arith.constant 6 : index
    %70 = memref.load %arg0[%c1_19, %c6_20] : memref<2x8xi32, #tpu.memory_space<smem>>
    %71 = vector.broadcast %70 : i32 to vector<64x32xi32>
    %72 = arith.select %69, %71, %67 : vector<64x32xi1>, vector<64x32xi32>
    %c56_i32 = arith.constant 56 : i32
    %73 = vector.broadcast %c56_i32 : i32 to vector<64x32xi32>
    %74 = arith.cmpi eq, %0, %73 : vector<64x32xi32>
    %c0_21 = arith.constant 0 : index
    %c7 = arith.constant 7 : index
    %75 = memref.load %arg0[%c0_21, %c7] : memref<2x8xi32, #tpu.memory_space<smem>>
    %76 = vector.broadcast %75 : i32 to vector<64x32xi32>
    %77 = arith.select %74, %76, %72 : vector<64x32xi1>, vector<64x32xi32>
    %c57_i32 = arith.constant 57 : i32
    %78 = vector.broadcast %c57_i32 : i32 to vector<64x32xi32>
    %79 = arith.cmpi eq, %0, %78 : vector<64x32xi32>
    %c1_22 = arith.constant 1 : index
    %c7_23 = arith.constant 7 : index
    %80 = memref.load %arg0[%c1_22, %c7_23] : memref<2x8xi32, #tpu.memory_space<smem>>
    %81 = vector.broadcast %80 : i32 to vector<64x32xi32>
    %82 = arith.select %79, %81, %77 : vector<64x32xi1>, vector<64x32xi32>
    %83 = arith.cmpi eq, %1, %82 : vector<64x32xi32>
    %84 = arith.extui %83 : vector<64x32xi1> to vector<64x32xi32>
    %85 = arith.sitofp %84 : vector<64x32xi32> to vector<64x32xf32>
    %c0_24 = arith.constant 0 : index
    %c0_25 = arith.constant 0 : index
    %86 = vector.load %arg1[%c0_24, %c0_25] : memref<32x128xf32, #tpu.memory_space<vmem>>, vector<32x128xf32>
    %cst = arith.constant dense<0.000000e+00> : vector<64x128xf32>
    %87 = tpu.matmul %85, %86, %cst {dimension_numbers = #tpu.dot_dimension_numbers<[1], [0], [0], [1], [0, 0, 1, 1], [], []>} : vector<64x32xf32>, vector<32x128xf32>, vector<64x128xf32> -> vector<64x128xf32>
    %c0_26 = arith.constant 0 : index
    %c0_27 = arith.constant 0 : index
    %88 = vector.load %arg2[%c0_26, %c0_27] : memref<32x128xf32, #tpu.memory_space<vmem>>, vector<32x128xf32>
    %89 = arith.truncf %88 : vector<32x128xf32> to vector<32x128xbf16>
    %cst_28 = arith.constant 0.000000e+00 : f32
    %90 = vector.broadcast %cst_28 : f32 to vector<8x32xf32>
    %cst_29 = arith.constant 0.000000e+00 : f32
    %91 = vector.broadcast %cst_29 : f32 to vector<8x32xf32>
    %92 = vector.extract_strided_slice %87 {offsets = [0, 0], sizes = [8, 128], strides = [1, 1]} : vector<64x128xf32> to vector<8x128xf32>
    %93 = arith.truncf %90 : vector<8x32xf32> to vector<8x32xbf16>
    %cst_30 = arith.constant dense<0.000000e+00> : vector<8x128xf32>
    %94 = tpu.matmul %93, %89, %cst_30 {dimension_numbers = #tpu.dot_dimension_numbers<[1], [0], [0], [1], [0, 0, 1, 1], [], []>} : vector<8x32xbf16>, vector<32x128xbf16>, vector<8x128xf32> -> vector<8x128xf32>
    %95 = arith.addf %94, %92 : vector<8x128xf32>
    %96 = arith.negf %95 : vector<8x128xf32>
    %97 = math.exp %96 : vector<8x128xf32>
    %cst_31 = arith.constant 1.000000e+00 : f32
    %98 = vector.broadcast %cst_31 : f32 to vector<8x128xf32>
    %99 = arith.addf %98, %97 : vector<8x128xf32>
    %100 = arith.divf %98, %99 : vector<8x128xf32>
    %101 = math.tanh %95 : vector<8x128xf32>
    %102 = vector.extract_strided_slice %100 {offsets = [0, 0], sizes = [8, 32], strides = [1, 1]} : vector<8x128xf32> to vector<8x32xf32>
    %103 = vector.extract_strided_slice %100 {offsets = [0, 32], sizes = [8, 32], strides = [1, 1]} : vector<8x128xf32> to vector<8x32xf32>
    %104 = vector.extract_strided_slice %101 {offsets = [0, 64], sizes = [8, 32], strides = [1, 1]} : vector<8x128xf32> to vector<8x32xf32>
    %105 = vector.extract_strided_slice %100 {offsets = [0, 96], sizes = [8, 32], strides = [1, 1]} : vector<8x128xf32> to vector<8x32xf32>
    %106 = arith.mulf %103, %91 : vector<8x32xf32>
    %107 = arith.mulf %102, %104 : vector<8x32xf32>
    %108 = arith.addf %106, %107 : vector<8x32xf32>
    %109 = math.tanh %108 : vector<8x32xf32>
    %110 = arith.mulf %105, %109 : vector<8x32xf32>
    %111 = vector.extract_strided_slice %87 {offsets = [8, 0], sizes = [8, 128], strides = [1, 1]} : vector<64x128xf32> to vector<8x128xf32>
    %112 = arith.truncf %110 : vector<8x32xf32> to vector<8x32xbf16>
    %cst_32 = arith.constant dense<0.000000e+00> : vector<8x128xf32>
    %113 = tpu.matmul %112, %89, %cst_32 {dimension_numbers = #tpu.dot_dimension_numbers<[1], [0], [0], [1], [0, 0, 1, 1], [], []>} : vector<8x32xbf16>, vector<32x128xbf16>, vector<8x128xf32> -> vector<8x128xf32>
    %114 = arith.addf %113, %111 : vector<8x128xf32>
    %115 = arith.negf %114 : vector<8x128xf32>
    %116 = math.exp %115 : vector<8x128xf32>
    %cst_33 = arith.constant 1.000000e+00 : f32
    %117 = vector.broadcast %cst_33 : f32 to vector<8x128xf32>
    %118 = arith.addf %117, %116 : vector<8x128xf32>
    %119 = arith.divf %117, %118 : vector<8x128xf32>
    %120 = math.tanh %114 : vector<8x128xf32>
    %121 = vector.extract_strided_slice %119 {offsets = [0, 0], sizes = [8, 32], strides = [1, 1]} : vector<8x128xf32> to vector<8x32xf32>
    %122 = vector.extract_strided_slice %119 {offsets = [0, 32], sizes = [8, 32], strides = [1, 1]} : vector<8x128xf32> to vector<8x32xf32>
    %123 = vector.extract_strided_slice %120 {offsets = [0, 64], sizes = [8, 32], strides = [1, 1]} : vector<8x128xf32> to vector<8x32xf32>
    %124 = vector.extract_strided_slice %119 {offsets = [0, 96], sizes = [8, 32], strides = [1, 1]} : vector<8x128xf32> to vector<8x32xf32>
    %125 = arith.mulf %122, %108 : vector<8x32xf32>
    %126 = arith.mulf %121, %123 : vector<8x32xf32>
    %127 = arith.addf %125, %126 : vector<8x32xf32>
    %128 = math.tanh %127 : vector<8x32xf32>
    %129 = arith.mulf %124, %128 : vector<8x32xf32>
    %130 = vector.extract_strided_slice %87 {offsets = [16, 0], sizes = [8, 128], strides = [1, 1]} : vector<64x128xf32> to vector<8x128xf32>
    %131 = arith.truncf %129 : vector<8x32xf32> to vector<8x32xbf16>
    %cst_34 = arith.constant dense<0.000000e+00> : vector<8x128xf32>
    %132 = tpu.matmul %131, %89, %cst_34 {dimension_numbers = #tpu.dot_dimension_numbers<[1], [0], [0], [1], [0, 0, 1, 1], [], []>} : vector<8x32xbf16>, vector<32x128xbf16>, vector<8x128xf32> -> vector<8x128xf32>
    %133 = arith.addf %132, %130 : vector<8x128xf32>
    %134 = arith.negf %133 : vector<8x128xf32>
    %135 = math.exp %134 : vector<8x128xf32>
    %cst_35 = arith.constant 1.000000e+00 : f32
    %136 = vector.broadcast %cst_35 : f32 to vector<8x128xf32>
    %137 = arith.addf %136, %135 : vector<8x128xf32>
    %138 = arith.divf %136, %137 : vector<8x128xf32>
    %139 = math.tanh %133 : vector<8x128xf32>
    %140 = vector.extract_strided_slice %138 {offsets = [0, 0], sizes = [8, 32], strides = [1, 1]} : vector<8x128xf32> to vector<8x32xf32>
    %141 = vector.extract_strided_slice %138 {offsets = [0, 32], sizes = [8, 32], strides = [1, 1]} : vector<8x128xf32> to vector<8x32xf32>
    %142 = vector.extract_strided_slice %139 {offsets = [0, 64], sizes = [8, 32], strides = [1, 1]} : vector<8x128xf32> to vector<8x32xf32>
    %143 = vector.extract_strided_slice %138 {offsets = [0, 96], sizes = [8, 32], strides = [1, 1]} : vector<8x128xf32> to vector<8x32xf32>
    %144 = arith.mulf %141, %127 : vector<8x32xf32>
    %145 = arith.mulf %140, %142 : vector<8x32xf32>
    %146 = arith.addf %144, %145 : vector<8x32xf32>
    %147 = math.tanh %146 : vector<8x32xf32>
    %148 = arith.mulf %143, %147 : vector<8x32xf32>
    %149 = vector.extract_strided_slice %87 {offsets = [24, 0], sizes = [8, 128], strides = [1, 1]} : vector<64x128xf32> to vector<8x128xf32>
    %150 = arith.truncf %148 : vector<8x32xf32> to vector<8x32xbf16>
    %cst_36 = arith.constant dense<0.000000e+00> : vector<8x128xf32>
    %151 = tpu.matmul %150, %89, %cst_36 {dimension_numbers = #tpu.dot_dimension_numbers<[1], [0], [0], [1], [0, 0, 1, 1], [], []>} : vector<8x32xbf16>, vector<32x128xbf16>, vector<8x128xf32> -> vector<8x128xf32>
    %152 = arith.addf %151, %149 : vector<8x128xf32>
    %153 = arith.negf %152 : vector<8x128xf32>
    %154 = math.exp %153 : vector<8x128xf32>
    %cst_37 = arith.constant 1.000000e+00 : f32
    %155 = vector.broadcast %cst_37 : f32 to vector<8x128xf32>
    %156 = arith.addf %155, %154 : vector<8x128xf32>
    %157 = arith.divf %155, %156 : vector<8x128xf32>
    %158 = math.tanh %152 : vector<8x128xf32>
    %159 = vector.extract_strided_slice %157 {offsets = [0, 0], sizes = [8, 32], strides = [1, 1]} : vector<8x128xf32> to vector<8x32xf32>
    %160 = vector.extract_strided_slice %157 {offsets = [0, 32], sizes = [8, 32], strides = [1, 1]} : vector<8x128xf32> to vector<8x32xf32>
    %161 = vector.extract_strided_slice %158 {offsets = [0, 64], sizes = [8, 32], strides = [1, 1]} : vector<8x128xf32> to vector<8x32xf32>
    %162 = vector.extract_strided_slice %157 {offsets = [0, 96], sizes = [8, 32], strides = [1, 1]} : vector<8x128xf32> to vector<8x32xf32>
    %163 = arith.mulf %160, %146 : vector<8x32xf32>
    %164 = arith.mulf %159, %161 : vector<8x32xf32>
    %165 = arith.addf %163, %164 : vector<8x32xf32>
    %166 = math.tanh %165 : vector<8x32xf32>
    %167 = arith.mulf %162, %166 : vector<8x32xf32>
    %168 = vector.extract_strided_slice %87 {offsets = [32, 0], sizes = [8, 128], strides = [1, 1]} : vector<64x128xf32> to vector<8x128xf32>
    %169 = arith.truncf %167 : vector<8x32xf32> to vector<8x32xbf16>
    %cst_38 = arith.constant dense<0.000000e+00> : vector<8x128xf32>
    %170 = tpu.matmul %169, %89, %cst_38 {dimension_numbers = #tpu.dot_dimension_numbers<[1], [0], [0], [1], [0, 0, 1, 1], [], []>} : vector<8x32xbf16>, vector<32x128xbf16>, vector<8x128xf32> -> vector<8x128xf32>
    %171 = arith.addf %170, %168 : vector<8x128xf32>
    %172 = arith.negf %171 : vector<8x128xf32>
    %173 = math.exp %172 : vector<8x128xf32>
    %cst_39 = arith.constant 1.000000e+00 : f32
    %174 = vector.broadcast %cst_39 : f32 to vector<8x128xf32>
    %175 = arith.addf %174, %173 : vector<8x128xf32>
    %176 = arith.divf %174, %175 : vector<8x128xf32>
    %177 = math.tanh %171 : vector<8x128xf32>
    %178 = vector.extract_strided_slice %176 {offsets = [0, 0], sizes = [8, 32], strides = [1, 1]} : vector<8x128xf32> to vector<8x32xf32>
    %179 = vector.extract_strided_slice %176 {offsets = [0, 32], sizes = [8, 32], strides = [1, 1]} : vector<8x128xf32> to vector<8x32xf32>
    %180 = vector.extract_strided_slice %177 {offsets = [0, 64], sizes = [8, 32], strides = [1, 1]} : vector<8x128xf32> to vector<8x32xf32>
    %181 = vector.extract_strided_slice %176 {offsets = [0, 96], sizes = [8, 32], strides = [1, 1]} : vector<8x128xf32> to vector<8x32xf32>
    %182 = arith.mulf %179, %165 : vector<8x32xf32>
    %183 = arith.mulf %178, %180 : vector<8x32xf32>
    %184 = arith.addf %182, %183 : vector<8x32xf32>
    %185 = math.tanh %184 : vector<8x32xf32>
    %186 = arith.mulf %181, %185 : vector<8x32xf32>
    %187 = vector.extract_strided_slice %87 {offsets = [40, 0], sizes = [8, 128], strides = [1, 1]} : vector<64x128xf32> to vector<8x128xf32>
    %188 = arith.truncf %186 : vector<8x32xf32> to vector<8x32xbf16>
    %cst_40 = arith.constant dense<0.000000e+00> : vector<8x128xf32>
    %189 = tpu.matmul %188, %89, %cst_40 {dimension_numbers = #tpu.dot_dimension_numbers<[1], [0], [0], [1], [0, 0, 1, 1], [], []>} : vector<8x32xbf16>, vector<32x128xbf16>, vector<8x128xf32> -> vector<8x128xf32>
    %190 = arith.addf %189, %187 : vector<8x128xf32>
    %191 = arith.negf %190 : vector<8x128xf32>
    %192 = math.exp %191 : vector<8x128xf32>
    %cst_41 = arith.constant 1.000000e+00 : f32
    %193 = vector.broadcast %cst_41 : f32 to vector<8x128xf32>
    %194 = arith.addf %193, %192 : vector<8x128xf32>
    %195 = arith.divf %193, %194 : vector<8x128xf32>
    %196 = math.tanh %190 : vector<8x128xf32>
    %197 = vector.extract_strided_slice %195 {offsets = [0, 0], sizes = [8, 32], strides = [1, 1]} : vector<8x128xf32> to vector<8x32xf32>
    %198 = vector.extract_strided_slice %195 {offsets = [0, 32], sizes = [8, 32], strides = [1, 1]} : vector<8x128xf32> to vector<8x32xf32>
    %199 = vector.extract_strided_slice %196 {offsets = [0, 64], sizes = [8, 32], strides = [1, 1]} : vector<8x128xf32> to vector<8x32xf32>
    %200 = vector.extract_strided_slice %195 {offsets = [0, 96], sizes = [8, 32], strides = [1, 1]} : vector<8x128xf32> to vector<8x32xf32>
    %201 = arith.mulf %198, %184 : vector<8x32xf32>
    %202 = arith.mulf %197, %199 : vector<8x32xf32>
    %203 = arith.addf %201, %202 : vector<8x32xf32>
    %204 = math.tanh %203 : vector<8x32xf32>
    %205 = arith.mulf %200, %204 : vector<8x32xf32>
    %206 = vector.extract_strided_slice %87 {offsets = [48, 0], sizes = [8, 128], strides = [1, 1]} : vector<64x128xf32> to vector<8x128xf32>
    %207 = arith.truncf %205 : vector<8x32xf32> to vector<8x32xbf16>
    %cst_42 = arith.constant dense<0.000000e+00> : vector<8x128xf32>
    %208 = tpu.matmul %207, %89, %cst_42 {dimension_numbers = #tpu.dot_dimension_numbers<[1], [0], [0], [1], [0, 0, 1, 1], [], []>} : vector<8x32xbf16>, vector<32x128xbf16>, vector<8x128xf32> -> vector<8x128xf32>
    %209 = arith.addf %208, %206 : vector<8x128xf32>
    %210 = arith.negf %209 : vector<8x128xf32>
    %211 = math.exp %210 : vector<8x128xf32>
    %cst_43 = arith.constant 1.000000e+00 : f32
    %212 = vector.broadcast %cst_43 : f32 to vector<8x128xf32>
    %213 = arith.addf %212, %211 : vector<8x128xf32>
    %214 = arith.divf %212, %213 : vector<8x128xf32>
    %215 = math.tanh %209 : vector<8x128xf32>
    %216 = vector.extract_strided_slice %214 {offsets = [0, 0], sizes = [8, 32], strides = [1, 1]} : vector<8x128xf32> to vector<8x32xf32>
    %217 = vector.extract_strided_slice %214 {offsets = [0, 32], sizes = [8, 32], strides = [1, 1]} : vector<8x128xf32> to vector<8x32xf32>
    %218 = vector.extract_strided_slice %215 {offsets = [0, 64], sizes = [8, 32], strides = [1, 1]} : vector<8x128xf32> to vector<8x32xf32>
    %219 = vector.extract_strided_slice %214 {offsets = [0, 96], sizes = [8, 32], strides = [1, 1]} : vector<8x128xf32> to vector<8x32xf32>
    %220 = arith.mulf %217, %203 : vector<8x32xf32>
    %221 = arith.mulf %216, %218 : vector<8x32xf32>
    %222 = arith.addf %220, %221 : vector<8x32xf32>
    %223 = math.tanh %222 : vector<8x32xf32>
    %224 = arith.mulf %219, %223 : vector<8x32xf32>
    %225 = vector.extract_strided_slice %87 {offsets = [56, 0], sizes = [8, 128], strides = [1, 1]} : vector<64x128xf32> to vector<8x128xf32>
    %226 = arith.truncf %224 : vector<8x32xf32> to vector<8x32xbf16>
    %cst_44 = arith.constant dense<0.000000e+00> : vector<8x128xf32>
    %227 = tpu.matmul %226, %89, %cst_44 {dimension_numbers = #tpu.dot_dimension_numbers<[1], [0], [0], [1], [0, 0, 1, 1], [], []>} : vector<8x32xbf16>, vector<32x128xbf16>, vector<8x128xf32> -> vector<8x128xf32>
    %228 = arith.addf %227, %225 : vector<8x128xf32>
    %229 = arith.negf %228 : vector<8x128xf32>
    %230 = math.exp %229 : vector<8x128xf32>
    %cst_45 = arith.constant 1.000000e+00 : f32
    %231 = vector.broadcast %cst_45 : f32 to vector<8x128xf32>
    %232 = arith.addf %231, %230 : vector<8x128xf32>
    %233 = arith.divf %231, %232 : vector<8x128xf32>
    %234 = math.tanh %228 : vector<8x128xf32>
    %235 = vector.extract_strided_slice %233 {offsets = [0, 0], sizes = [8, 32], strides = [1, 1]} : vector<8x128xf32> to vector<8x32xf32>
    %236 = vector.extract_strided_slice %233 {offsets = [0, 32], sizes = [8, 32], strides = [1, 1]} : vector<8x128xf32> to vector<8x32xf32>
    %237 = vector.extract_strided_slice %234 {offsets = [0, 64], sizes = [8, 32], strides = [1, 1]} : vector<8x128xf32> to vector<8x32xf32>
    %238 = vector.extract_strided_slice %233 {offsets = [0, 96], sizes = [8, 32], strides = [1, 1]} : vector<8x128xf32> to vector<8x32xf32>
    %239 = arith.mulf %236, %222 : vector<8x32xf32>
    %240 = arith.mulf %235, %237 : vector<8x32xf32>
    %241 = arith.addf %239, %240 : vector<8x32xf32>
    %242 = math.tanh %241 : vector<8x32xf32>
    %243 = arith.mulf %238, %242 : vector<8x32xf32>
    %c0_46 = arith.constant 0 : index
    %c0_47 = arith.constant 0 : index
    %244 = vector.load %arg3[%c0_46, %c0_47] : memref<32x128xf32, #tpu.memory_space<vmem>>, vector<32x128xf32>
    %cst_48 = arith.constant dense<0.000000e+00> : vector<8x128xf32>
    %245 = tpu.matmul %243, %244, %cst_48 {dimension_numbers = #tpu.dot_dimension_numbers<[1], [0], [0], [1], [0, 0, 1, 1], [], []>} : vector<8x32xf32>, vector<32x128xf32>, vector<8x128xf32> -> vector<8x128xf32>
    %c0_49 = arith.constant 0 : index
    %c0_50 = arith.constant 0 : index
    %246 = vector.load %arg4[%c0_49, %c0_50] : memref<1x128xf32, #tpu.memory_space<vmem>>, vector<1x128xf32>
    %247 = vector.broadcast %246 : vector<1x128xf32> to vector<8x128xf32>
    %248 = arith.addf %245, %247 : vector<8x128xf32>
    %c0_51 = arith.constant 0 : index
    %c0_52 = arith.constant 0 : index
    %249 = vector.load %arg5[%c0_51, %c0_52] : memref<8x128xf32, #tpu.memory_space<vmem>>, vector<8x128xf32>
    tpu.vector_store %arg5[%c0_51, %c0_52], %248 {strides = array<i32>} : memref<8x128xf32, #tpu.memory_space<vmem>>, vector<8x128xf32>,
    return
  }
}

</mosaic_0001>

<llo_original>
// kernel: tpu_custom_call.1
$region0: #{tpu_custom_call.1}
  #allocation0 [shape = 'u32[]', space=smem, size = 0x4, offset = 0x4, fixed_abs, tag = 'smem constant byte address 0x4 - core index']
  #allocation1 [shape = 'u32[144,128]{1,0:T(1,128)}', space=vmem, size = 0x12000, scoped, tag = 'internal scratch']
  %s0 = inlined_call_operand.hbm [shape: s32[2,8], index: 0, kind: input, shape index: {}]
  %s1 = inlined_call_operand.hbm [shape: f32[32,128], index: 1, kind: input, shape index: {}]
  %s2 = inlined_call_operand.hbm [shape: f32[32,128], index: 2, kind: input, shape index: {}]
  %s3 = inlined_call_operand.hbm [shape: f32[32,128], index: 3, kind: input, shape index: {}]
  %s4 = inlined_call_operand.vmem [shape: f32[1,128], index: 4, kind: input, shape index: {}]
  %s5 = inlined_call_operand.hbm [shape: f32[8,128], index: 5, kind: output, shape index: {}]
  %s6 = sld [smem:[#allocation0]]
  $region46: #{tpu_custom_call.1} parent=0
    _
  %s8 = ssub.s32 1, %s6
  %s9 = scalar_select 0, %s8, %s6
  $region1: #{tpu_custom_call.1} parent=0
    #allocation2 [shape = 'u8[1024]{0}', space=smem, size = 0x400, scoped, tag = 'input window, operand 0, single buffered']
    #allocation3 [shape = 's32[1]{0}', space=sflag, size = 0x4, scoped, tag = 'scoped memory for tpu_custom_call.1']
    #allocation4 [shape = 's32[1]{0}', space=sflag, size = 0x4, scoped, tag = 'scoped memory for tpu_custom_call.1']
    #allocation5 [shape = 's32[1]{0}', space=sflag, size = 0x4, scoped, tag = 'scoped memory for tpu_custom_call.1']
    #allocation6 [shape = 'u8[16384]{0}', space=vmem, size = 0x4000, scoped, tag = 'input window, operand 1, single buffered']
    #allocation7 [shape = 'u8[16384]{0}', space=vmem, size = 0x4000, scoped, tag = 'input window, operand 2, single buffered']
    #allocation8 [shape = 's32[1]{0}', space=sflag, size = 0x4, scoped, tag = 'scoped memory for tpu_custom_call.1']
    #allocation9 [shape = 'u8[16384]{0}', space=vmem, size = 0x4000, scoped, tag = 'input window, operand 3, single buffered']
    #allocation10 [shape = 'u8[4096]{0}', space=vmem, size = 0x1000, scoped, tag = 'output window, operand 0, single buffered']
    %10 = vsyncpa [#allocation5], 0
    %11 = vsyncpa [#allocation3], 0
    %12 = vsyncpa [#allocation8], 0
    %13 = vsyncpa [#allocation4], 0
    // Predicated region
    $region2: #{tpu_custom_call.1} parent=1 // pred_check
      _
    $region3: #{tpu_custom_call.1} parent=1 // pred_check_branch
      %15 = sbr.rel (0) target = $region5
    $region4: #{tpu_custom_call.1} parent=1 // pred_region
      %s17 = ssub.s32 32, 32
      %18 = vsyncadd [#allocation5], %s17
      %21 = dma.hbm_to_smem %s0, 32, [#allocation2], [#allocation5]
    $region5: #{tpu_custom_call.1} parent=1 // pred_fallthru
      _
    // Predicated region
    $region6: #{tpu_custom_call.1} parent=1 // pred_check
      _
    $region7: #{tpu_custom_call.1} parent=1 // pred_check_branch
      %23 = sbr.rel (0) target = $region9
    $region8: #{tpu_custom_call.1} parent=1 // pred_region
      %s25 = ssub.s32 512, 512
      %26 = vsyncadd [#allocation3], %s25
      %s27 = sshll.u32 [#allocation6], 4
      %s28 = int_to_ptr.vmem [resolvable:$true] %s27
      %33 = dma.hbm_to_vmem [thread:$0]  %s1, 512, %s28, [#allocation3], 128, 128, 8
    $region9: #{tpu_custom_call.1} parent=1 // pred_fallthru
      _
    // Predicated region
    $region10: #{tpu_custom_call.1} parent=1 // pred_check
      _
    $region11: #{tpu_custom_call.1} parent=1 // pred_check_branch
      %35 = sbr.rel (0) target = $region13
    $region12: #{tpu_custom_call.1} parent=1 // pred_region
      %s37 = ssub.s32 512, 512
      %38 = vsyncadd [#allocation8], %s37
      %s39 = sshll.u32 [#allocation7], 4
      %s40 = int_to_ptr.vmem [resolvable:$true] %s39
      %45 = dma.hbm_to_vmem [thread:$0]  %s2, 512, %s40, [#allocation8], 128, 128, 8
    $region13: #{tpu_custom_call.1} parent=1 // pred_fallthru
      _
    // Predicated region
    $region14: #{tpu_custom_call.1} parent=1 // pred_check
      _
    $region15: #{tpu_custom_call.1} parent=1 // pred_check_branch
      %47 = sbr.rel (0) target = $region17
    $region16: #{tpu_custom_call.1} parent=1 // pred_region
      %s49 = ssub.s32 512, 512
      %50 = vsyncadd [#allocation8], %s49
      %s51 = sshll.u32 [#allocation9], 4
      %s52 = int_to_ptr.vmem [resolvable:$true] %s51
      %57 = dma.hbm_to_vmem [thread:$0]  %s3, 512, %s52, [#allocation8], 128, 128, 8
    $region17: #{tpu_custom_call.1} parent=1 // pred_fallthru
      _
    // Predicated region
    $region18: #{tpu_custom_call.1} parent=1 // pred_check
      _
    $region19: #{tpu_custom_call.1} parent=1 // pred_check_branch
      %59 = sbr.rel (0) target = $region21
    $region20: #{tpu_custom_call.1} parent=1 // pred_region
      _
    $region21: #{tpu_custom_call.1} parent=1 // pred_fallthru
      _
    // Predicated region
    $region22: #{tpu_custom_call.1} parent=1 // pred_check
      _
    $region23: #{tpu_custom_call.1} parent=1 // pred_check_branch
      %61 = sbr.rel (0) target = $region25
    $region24: #{tpu_custom_call.1} parent=1 // pred_region
      %62 = dma.done [#allocation5], 32
    $region25: #{tpu_custom_call.1} parent=1 // pred_fallthru
      _
    // Predicated region
    $region26: #{tpu_custom_call.1} parent=1 // pred_check
      _
    $region27: #{tpu_custom_call.1} parent=1 // pred_check_branch
      %64 = sbr.rel (0) target = $region29
    $region28: #{tpu_custom_call.1} parent=1 // pred_region
      %65 = dma.done [#allocation3], 512
    $region29: #{tpu_custom_call.1} parent=1 // pred_fallthru
      _
    // Predicated region
    $region30: #{tpu_custom_call.1} parent=1 // pred_check
      _
    $region31: #{tpu_custom_call.1} parent=1 // pred_check_branch
      %67 = sbr.rel (0) target = $region33
    $region32: #{tpu_custom_call.1} parent=1 // pred_region
      %68 = dma.done [#allocation8], 512
    $region33: #{tpu_custom_call.1} parent=1 // pred_fallthru
      _
    // Predicated region
    $region34: #{tpu_custom_call.1} parent=1 // pred_check
      _
    $region35: #{tpu_custom_call.1} parent=1 // pred_check_branch
      %70 = sbr.rel (0) target = $region37
    $region36: #{tpu_custom_call.1} parent=1 // pred_region
      %71 = dma.done [#allocation8], 512
    $region37: #{tpu_custom_call.1} parent=1 // pred_fallthru
      _
    %72 = sfence
    %v74 = vlaneseq
    %v75 = vshrl.u32 %v74, 7
    %v76 = vadd.s32 %v75, 8
    %v77 = vadd.s32 %v75, 16
    %v78 = vadd.s32 %v75, 24
    %v79 = vadd.s32 %v75, 32
    %v80 = vadd.s32 %v75, 40
    %v81 = vadd.s32 %v75, 48
    %v82 = vadd.s32 %v75, 56
    %v83 = vlaneseq
    %v84 = vand.u32 %v83, 127
    %vm85 = vcmp.eq.s32.totalorder %v75, 0
    %vm86 = vcmp.eq.s32.totalorder %v76, 0
    %vm87 = vcmp.eq.s32.totalorder %v77, 0
    %vm88 = vcmp.eq.s32.totalorder %v78, 0
    %vm89 = vcmp.eq.s32.totalorder %v79, 0
    %vm90 = vcmp.eq.s32.totalorder %v80, 0
    %vm91 = vcmp.eq.s32.totalorder %v81, 0
    %vm92 = vcmp.eq.s32.totalorder %v82, 0
    %s93 = sld [smem:[#allocation2]]
    %v94 = vstv %s93
    %v95 = vsel %vm85, %v94, 4294967295
    %v96 = vsel %vm86, %v94, 4294967295
    %v97 = vsel %vm87, %v94, 4294967295
    %v98 = vsel %vm88, %v94, 4294967295
    %v99 = vsel %vm89, %v94, 4294967295
    %v100 = vsel %vm90, %v94, 4294967295
    %v101 = vsel %vm91, %v94, 4294967295
    %v102 = vsel %vm92, %v94, 4294967295
    %vm103 = vcmp.eq.s32.totalorder %v75, 1
    %vm104 = vcmp.eq.s32.totalorder %v76, 1
    %vm105 = vcmp.eq.s32.totalorder %v77, 1
    %vm106 = vcmp.eq.s32.totalorder %v78, 1
    %vm107 = vcmp.eq.s32.totalorder %v79, 1
    %vm108 = vcmp.eq.s32.totalorder %v80, 1
    %vm109 = vcmp.eq.s32.totalorder %v81, 1
    %vm110 = vcmp.eq.s32.totalorder %v82, 1
    %s111 = sld [smem:[#allocation2 + $0x80]]
    %v112 = vstv %s111
    %v113 = vsel %vm103, %v112, %v95
    %v114 = vsel %vm104, %v112, %v96
    %v115 = vsel %vm105, %v112, %v97
    %v116 = vsel %vm106, %v112, %v98
    %v117 = vsel %vm107, %v112, %v99
    %v118 = vsel %vm108, %v112, %v100
    %v119 = vsel %vm109, %v112, %v101
    %v120 = vsel %vm110, %v112, %v102
    %vm121 = vcmp.eq.s32.totalorder %v75, 8
    %vm122 = vcmp.eq.s32.totalorder %v76, 8
    %vm123 = vcmp.eq.s32.totalorder %v77, 8
    %vm124 = vcmp.eq.s32.totalorder %v78, 8
    %vm125 = vcmp.eq.s32.totalorder %v79, 8
    %vm126 = vcmp.eq.s32.totalorder %v80, 8
    %vm127 = vcmp.eq.s32.totalorder %v81, 8
    %vm128 = vcmp.eq.s32.totalorder %v82, 8
    %s129 = sld [smem:[#allocation2 + $0x1]]
    %v130 = vstv %s129
    %v131 = vsel %vm121, %v130, %v113
    %v132 = vsel %vm122, %v130, %v114
    %v133 = vsel %vm123, %v130, %v115
    %v134 = vsel %vm124, %v130, %v116
    %v135 = vsel %vm125, %v130, %v117
    %v136 = vsel %vm126, %v130, %v118
    %v137 = vsel %vm127, %v130, %v119
    %v138 = vsel %vm128, %v130, %v120
    %vm139 = vcmp.eq.s32.totalorder %v75, 9
    %vm140 = vcmp.eq.s32.totalorder %v76, 9
    %vm141 = vcmp.eq.s32.totalorder %v77, 9
    %vm142 = vcmp.eq.s32.totalorder %v78, 9
    %vm143 = vcmp.eq.s32.totalorder %v79, 9
    %vm144 = vcmp.eq.s32.totalorder %v80, 9
    %vm145 = vcmp.eq.s32.totalorder %v81, 9
    %vm146 = vcmp.eq.s32.totalorder %v82, 9
    %s147 = sld [smem:[#allocation2 + $0x81]]
    %v148 = vstv %s147
    %v149 = vsel %vm139, %v148, %v131
    %v150 = vsel %vm140, %v148, %v132
    %v151 = vsel %vm141, %v148, %v133
    %v152 = vsel %vm142, %v148, %v134
    %v153 = vsel %vm143, %v148, %v135
    %v154 = vsel %vm144, %v148, %v136
    %v155 = vsel %vm145, %v148, %v137
    %v156 = vsel %vm146, %v148, %v138
    %vm157 = vcmp.eq.s32.totalorder %v75, 16
    %vm158 = vcmp.eq.s32.totalorder %v76, 16
    %vm159 = vcmp.eq.s32.totalorder %v77, 16
    %vm160 = vcmp.eq.s32.totalorder %v78, 16
    %vm161 = vcmp.eq.s32.totalorder %v79, 16
    %vm162 = vcmp.eq.s32.totalorder %v80, 16
    %vm163 = vcmp.eq.s32.totalorder %v81, 16
    %vm164 = vcmp.eq.s32.totalorder %v82, 16
    %s165 = sld [smem:[#allocation2 + $0x2]]
    %v166 = vstv %s165
    %v167 = vsel %vm157, %v166, %v149
    %v168 = vsel %vm158, %v166, %v150
    %v169 = vsel %vm159, %v166, %v151
    %v170 = vsel %vm160, %v166, %v152
    %v171 = vsel %vm161, %v166, %v153
    %v172 = vsel %vm162, %v166, %v154
    %v173 = vsel %vm163, %v166, %v155
    %v174 = vsel %vm164, %v166, %v156
    %vm175 = vcmp.eq.s32.totalorder %v75, 17
    %vm176 = vcmp.eq.s32.totalorder %v76, 17
    %vm177 = vcmp.eq.s32.totalorder %v77, 17
    %vm178 = vcmp.eq.s32.totalorder %v78, 17
    %vm179 = vcmp.eq.s32.totalorder %v79, 17
    %vm180 = vcmp.eq.s32.totalorder %v80, 17
    %vm181 = vcmp.eq.s32.totalorder %v81, 17
    %vm182 = vcmp.eq.s32.totalorder %v82, 17
    %s183 = sld [smem:[#allocation2 + $0x82]]
    %v184 = vstv %s183
    %v185 = vsel %vm175, %v184, %v167
    %v186 = vsel %vm176, %v184, %v168
    %v187 = vsel %vm177, %v184, %v169
    %v188 = vsel %vm178, %v184, %v170
    %v189 = vsel %vm179, %v184, %v171
    %v190 = vsel %vm180, %v184, %v172
    %v191 = vsel %vm181, %v184, %v173
    %v192 = vsel %vm182, %v184, %v174
    %vm193 = vcmp.eq.s32.totalorder %v75, 24
    %vm194 = vcmp.eq.s32.totalorder %v76, 24
    %vm195 = vcmp.eq.s32.totalorder %v77, 24
    %vm196 = vcmp.eq.s32.totalorder %v78, 24
    %vm197 = vcmp.eq.s32.totalorder %v79, 24
    %vm198 = vcmp.eq.s32.totalorder %v80, 24
    %vm199 = vcmp.eq.s32.totalorder %v81, 24
    %vm200 = vcmp.eq.s32.totalorder %v82, 24
    %s201 = sld [smem:[#allocation2 + $0x3]]
    %v202 = vstv %s201
    %v203 = vsel %vm193, %v202, %v185
    %v204 = vsel %vm194, %v202, %v186
    %v205 = vsel %vm195, %v202, %v187
    %v206 = vsel %vm196, %v202, %v188
    %v207 = vsel %vm197, %v202, %v189
    %v208 = vsel %vm198, %v202, %v190
    %v209 = vsel %vm199, %v202, %v191
    %v210 = vsel %vm200, %v202, %v192
    %vm211 = vcmp.eq.s32.totalorder %v75, 25
    %vm212 = vcmp.eq.s32.totalorder %v76, 25
    %vm213 = vcmp.eq.s32.totalorder %v77, 25
    %vm214 = vcmp.eq.s32.totalorder %v78, 25
    %vm215 = vcmp.eq.s32.totalorder %v79, 25
    %vm216 = vcmp.eq.s32.totalorder %v80, 25
    %vm217 = vcmp.eq.s32.totalorder %v81, 25
    %vm218 = vcmp.eq.s32.totalorder %v82, 25
    %s219 = sld [smem:[#allocation2 + $0x83]]
    %v220 = vstv %s219
    %v221 = vsel %vm211, %v220, %v203
    %v222 = vsel %vm212, %v220, %v204
    %v223 = vsel %vm213, %v220, %v205
    %v224 = vsel %vm214, %v220, %v206
    %v225 = vsel %vm215, %v220, %v207
    %v226 = vsel %vm216, %v220, %v208
    %v227 = vsel %vm217, %v220, %v209
    %v228 = vsel %vm218, %v220, %v210
    %vm229 = vcmp.eq.s32.totalorder %v75, 32
    %vm230 = vcmp.eq.s32.totalorder %v76, 32
    %vm231 = vcmp.eq.s32.totalorder %v77, 32
    %vm232 = vcmp.eq.s32.totalorder %v78, 32
    %vm233 = vcmp.eq.s32.totalorder %v79, 32
    %vm234 = vcmp.eq.s32.totalorder %v80, 32
    %vm235 = vcmp.eq.s32.totalorder %v81, 32
    %vm236 = vcmp.eq.s32.totalorder %v82, 32
    %s237 = sld [smem:[#allocation2 + $0x4]]
    %v238 = vstv %s237
    %v239 = vsel %vm229, %v238, %v221
    %v240 = vsel %vm230, %v238, %v222
    %v241 = vsel %vm231, %v238, %v223
    %v242 = vsel %vm232, %v238, %v224
    %v243 = vsel %vm233, %v238, %v225
    %v244 = vsel %vm234, %v238, %v226
    %v245 = vsel %vm235, %v238, %v227
    %v246 = vsel %vm236, %v238, %v228
    %vm247 = vcmp.eq.s32.totalorder %v75, 33
    %vm248 = vcmp.eq.s32.totalorder %v76, 33
    %vm249 = vcmp.eq.s32.totalorder %v77, 33
    %vm250 = vcmp.eq.s32.totalorder %v78, 33
    %vm251 = vcmp.eq.s32.totalorder %v79, 33
    %vm252 = vcmp.eq.s32.totalorder %v80, 33
    %vm253 = vcmp.eq.s32.totalorder %v81, 33
    %vm254 = vcmp.eq.s32.totalorder %v82, 33
    %s255 = sld [smem:[#allocation2 + $0x84]]
    %v256 = vstv %s255
    %v257 = vsel %vm247, %v256, %v239
    %v258 = vsel %vm248, %v256, %v240
    %v259 = vsel %vm249, %v256, %v241
    %v260 = vsel %vm250, %v256, %v242
    %v261 = vsel %vm251, %v256, %v243
    %v262 = vsel %vm252, %v256, %v244
    %v263 = vsel %vm253, %v256, %v245
    %v264 = vsel %vm254, %v256, %v246
    %vm265 = vcmp.eq.s32.totalorder %v75, 40
    %vm266 = vcmp.eq.s32.totalorder %v76, 40
    %vm267 = vcmp.eq.s32.totalorder %v77, 40
    %vm268 = vcmp.eq.s32.totalorder %v78, 40
    %vm269 = vcmp.eq.s32.totalorder %v79, 40
    %vm270 = vcmp.eq.s32.totalorder %v80, 40
    %vm271 = vcmp.eq.s32.totalorder %v81, 40
    %vm272 = vcmp.eq.s32.totalorder %v82, 40
    %s273 = sld [smem:[#allocation2 + $0x5]]
    %v274 = vstv %s273
    %v275 = vsel %vm265, %v274, %v257
    %v276 = vsel %vm266, %v274, %v258
    %v277 = vsel %vm267, %v274, %v259
    %v278 = vsel %vm268, %v274, %v260
    %v279 = vsel %vm269, %v274, %v261
    %v280 = vsel %vm270, %v274, %v262
    %v281 = vsel %vm271, %v274, %v263
    %v282 = vsel %vm272, %v274, %v264
    %vm283 = vcmp.eq.s32.totalorder %v75, 41
    %vm284 = vcmp.eq.s32.totalorder %v76, 41
    %vm285 = vcmp.eq.s32.totalorder %v77, 41
    %vm286 = vcmp.eq.s32.totalorder %v78, 41
    %vm287 = vcmp.eq.s32.totalorder %v79, 41
    %vm288 = vcmp.eq.s32.totalorder %v80, 41
    %vm289 = vcmp.eq.s32.totalorder %v81, 41
    %vm290 = vcmp.eq.s32.totalorder %v82, 41
    %s291 = sld [smem:[#allocation2 + $0x85]]
    %v292 = vstv %s291
    %v293 = vsel %vm283, %v292, %v275
    %v294 = vsel %vm284, %v292, %v276
    %v295 = vsel %vm285, %v292, %v277
    %v296 = vsel %vm286, %v292, %v278
    %v297 = vsel %vm287, %v292, %v279
    %v298 = vsel %vm288, %v292, %v280
    %v299 = vsel %vm289, %v292, %v281
    %v300 = vsel %vm290, %v292, %v282
    %vm301 = vcmp.eq.s32.totalorder %v75, 48
    %vm302 = vcmp.eq.s32.totalorder %v76, 48
    %vm303 = vcmp.eq.s32.totalorder %v77, 48
    %vm304 = vcmp.eq.s32.totalorder %v78, 48
    %vm305 = vcmp.eq.s32.totalorder %v79, 48
    %vm306 = vcmp.eq.s32.totalorder %v80, 48
    %vm307 = vcmp.eq.s32.totalorder %v81, 48
    %vm308 = vcmp.eq.s32.totalorder %v82, 48
    %s309 = sld [smem:[#allocation2 + $0x6]]
    %v310 = vstv %s309
    %v311 = vsel %vm301, %v310, %v293
    %v312 = vsel %vm302, %v310, %v294
    %v313 = vsel %vm303, %v310, %v295
    %v314 = vsel %vm304, %v310, %v296
    %v315 = vsel %vm305, %v310, %v297
    %v316 = vsel %vm306, %v310, %v298
    %v317 = vsel %vm307, %v310, %v299
    %v318 = vsel %vm308, %v310, %v300
    %vm319 = vcmp.eq.s32.totalorder %v75, 49
    %vm320 = vcmp.eq.s32.totalorder %v76, 49
    %vm321 = vcmp.eq.s32.totalorder %v77, 49
    %vm322 = vcmp.eq.s32.totalorder %v78, 49
    %vm323 = vcmp.eq.s32.totalorder %v79, 49
    %vm324 = vcmp.eq.s32.totalorder %v80, 49
    %vm325 = vcmp.eq.s32.totalorder %v81, 49
    %vm326 = vcmp.eq.s32.totalorder %v82, 49
    %s327 = sld [smem:[#allocation2 + $0x86]]
    %v328 = vstv %s327
    %v329 = vsel %vm319, %v328, %v311
    %v330 = vsel %vm320, %v328, %v312
    %v331 = vsel %vm321, %v328, %v313
    %v332 = vsel %vm322, %v328, %v314
    %v333 = vsel %vm323, %v328, %v315
    %v334 = vsel %vm324, %v328, %v316
    %v335 = vsel %vm325, %v328, %v317
    %v336 = vsel %vm326, %v328, %v318
    %vm337 = vcmp.eq.s32.totalorder %v75, 56
    %vm338 = vcmp.eq.s32.totalorder %v76, 56
    %vm339 = vcmp.eq.s32.totalorder %v77, 56
    %vm340 = vcmp.eq.s32.totalorder %v78, 56
    %vm341 = vcmp.eq.s32.totalorder %v79, 56
    %vm342 = vcmp.eq.s32.totalorder %v80, 56
    %vm343 = vcmp.eq.s32.totalorder %v81, 56
    %vm344 = vcmp.eq.s32.totalorder %v82, 56
    %s345 = sld [smem:[#allocation2 + $0x7]]
    %v346 = vstv %s345
    %v347 = vsel %vm337, %v346, %v329
    %v348 = vsel %vm338, %v346, %v330
    %v349 = vsel %vm339, %v346, %v331
    %v350 = vsel %vm340, %v346, %v332
    %v351 = vsel %vm341, %v346, %v333
    %v352 = vsel %vm342, %v346, %v334
    %v353 = vsel %vm343, %v346, %v335
    %v354 = vsel %vm344, %v346, %v336
    %vm355 = vcmp.eq.s32.totalorder %v75, 57
    %vm356 = vcmp.eq.s32.totalorder %v76, 57
    %vm357 = vcmp.eq.s32.totalorder %v77, 57
    %vm358 = vcmp.eq.s32.totalorder %v78, 57
    %vm359 = vcmp.eq.s32.totalorder %v79, 57
    %vm360 = vcmp.eq.s32.totalorder %v80, 57
    %vm361 = vcmp.eq.s32.totalorder %v81, 57
    %vm362 = vcmp.eq.s32.totalorder %v82, 57
    %s363 = sld [smem:[#allocation2 + $0x87]]
    %v364 = vstv %s363
    %v365 = vsel %vm355, %v364, %v347
    %v366 = vsel %vm356, %v364, %v348
    %v367 = vsel %vm357, %v364, %v349
    %v368 = vsel %vm358, %v364, %v350
    %v369 = vsel %vm359, %v364, %v351
    %v370 = vsel %vm360, %v364, %v352
    %v371 = vsel %vm361, %v364, %v353
    %v372 = vsel %vm362, %v364, %v354
    %vm373 = vcmp.eq.s32.totalorder %v84, %v365
    %vm374 = vcmp.eq.s32.totalorder %v84, %v366
    %vm375 = vcmp.eq.s32.totalorder %v84, %v367
    %vm376 = vcmp.eq.s32.totalorder %v84, %v368
    %vm377 = vcmp.eq.s32.totalorder %v84, %v369
    %vm378 = vcmp.eq.s32.totalorder %v84, %v370
    %vm379 = vcmp.eq.s32.totalorder %v84, %v371
    %vm380 = vcmp.eq.s32.totalorder %v84, %v372
    %v381 = vsel %vm373, 1, 0
    %v382 = vsel %vm374, 1, 0
    %v383 = vsel %vm375, 1, 0
    %v384 = vsel %vm376, 1, 0
    %v385 = vsel %vm377, 1, 0
    %v386 = vsel %vm378, 1, 0
    %v387 = vsel %vm379, 1, 0
    %v388 = vsel %vm380, 1, 0
    %v389 = vcvt.s32.f32 %v381
    %v390 = vcvt.s32.f32 %v382
    %v391 = vcvt.s32.f32 %v383
    %v392 = vcvt.s32.f32 %v384
    %v393 = vcvt.s32.f32 %v385
    %v394 = vcvt.s32.f32 %v386
    %v395 = vcvt.s32.f32 %v387
    %v396 = vcvt.s32.f32 %v388
    %v397 = vld [vmem:[#allocation6] sm:$0xff]
    %v398 = vld [vmem:[#allocation6 + $0x8] sm:$0xff]
    %v399 = vld [vmem:[#allocation6 + $0x10] sm:$0xff]
    %v400 = vld [vmem:[#allocation6 + $0x18] sm:$0xff]
    %vm401 = vcmask 261120
    %v403 = vsel %vm401, %v389, 0
    %v406 = vsel %vm401, %v390, 0
    %v409 = vsel %vm401, %v391, 0
    %v412 = vsel %vm401, %v392, 0
    %v415 = vsel %vm401, %v393, 0
    %v418 = vsel %vm401, %v394, 0
    %v421 = vsel %vm401, %v395, 0
    %v424 = vsel %vm401, %v396, 0
    %426 = vmatprep.subr.mxu0 0.0
    %427 = vmatpush1.msra.mxu0 0.0
    %428 = vmatprep.subr.mxu0 0.0
    %429 = vmatpush1.msra.mxu0 0.0
    %430 = vmatprep.subr.mxu0 0.0
    %431 = vmatpush1.msra.mxu0 0.0
    %432 = vmatprep.subr.mxu0 0.0
    %433 = vmatpush1.msra.mxu0 0.0
    %434 = vmatprep.subr.mxu0 0.0
    %435 = vmatpush1.msra.mxu0 0.0
    %436 = vmatprep.subr.mxu0 0.0
    %437 = vmatpush1.msra.mxu0 0.0
    %438 = vmatprep.subr.mxu0 0.0
    %439 = vmatpush1.msra.mxu0 0.0
    %440 = vmatprep.subr.mxu0 0.0
    %441 = vmatpush1.msra.mxu0 0.0
    %442 = vmatprep.subr.mxu0 0.0
    %443 = vmatpush1.msra.mxu0 0.0
    %444 = vmatprep.subr.mxu0 0.0
    %445 = vmatpush1.msra.mxu0 0.0
    %446 = vmatprep.subr.mxu0 0.0
    %447 = vmatpush1.msra.mxu0 0.0
    %448 = vmatprep.subr.mxu0 0.0
    %449 = vmatpush1.msra.mxu0 0.0
    %450 = vmatprep.subr.mxu0 0.0
    %451 = vmatpush1.msra.mxu0 %v400
    %452 = vmatprep.subr.mxu0 0.0
    %453 = vmatpush1.msra.mxu0 %v399
    %454 = vmatprep.subr.mxu0 0.0
    %455 = vmatpush1.msra.mxu0 %v398
    %456 = vmatprep.subr.mxu0 0.0
    %457 = vmatpush1.msra.mxu0 %v397
    %458 = vmatprep.subr.mxu0 0.0
    %459 = vmatpush2.msra.mxu0 0.0
    %460 = vmatprep.subr.mxu0 0.0
    %461 = vmatpush2.msra.mxu0 0.0
    %462 = vmatprep.subr.mxu0 0.0
    %463 = vmatpush2.msra.mxu0 0.0
    %464 = vmatprep.subr.mxu0 0.0
    %465 = vmatpush2.msra.mxu0 0.0
    %466 = vmatprep.subr.mxu0 0.0
    %467 = vmatpush2.msra.mxu0 0.0
    %468 = vmatprep.subr.mxu0 0.0
    %469 = vmatpush2.msra.mxu0 0.0
    %470 = vmatprep.subr.mxu0 0.0
    %471 = vmatpush2.msra.mxu0 0.0
    %472 = vmatprep.subr.mxu0 0.0
    %473 = vmatpush2.msra.mxu0 0.0
    %474 = vmatprep.subr.mxu0 0.0
    %475 = vmatpush2.msra.mxu0 0.0
    %476 = vmatprep.subr.mxu0 0.0
    %477 = vmatpush2.msra.mxu0 0.0
    %478 = vmatprep.subr.mxu0 0.0
    %479 = vmatpush2.msra.mxu0 0.0
    %480 = vmatprep.subr.mxu0 0.0
    %481 = vmatpush2.msra.mxu0 0.0
    %482 = vmatprep.subr.mxu0 0.0
    %483 = vmatpush2.msra.mxu0 0.0
    %484 = vmatprep.subr.mxu0 0.0
    %485 = vmatpush2.msra.mxu0 0.0
    %486 = vmatprep.subr.mxu0 0.0
    %487 = vmatpush2.msra.mxu0 0.0
    %488 = vmatprep.subr.mxu0 0.0
    %489 = vmatpush2.msra.mxu0 0.0
    %490 = vmatprep.mubr.f32.mxu0 0.0
    %491 = vmatmul.mubr.f32.gmra.mxu0 %v403
    %v492 = vpop.f32.mrf.mxu0
    %v493 = vadd.f32 0.0, %v492
    %v494 = vpop.f32.mrf.mxu0
    %495 = vmatprep.mubr.f32.mxu0 0.0
    %496 = vmatmul.mubr.f32.gmra.mxu0 %v406
    %v497 = vpop.f32.mrf.mxu0
    %v498 = vadd.f32 0.0, %v497
    %v499 = vpop.f32.mrf.mxu0
    %500 = vmatprep.mubr.f32.mxu0 0.0
    %501 = vmatmul.mubr.f32.gmra.mxu0 %v409
    %v502 = vpop.f32.mrf.mxu0
    %v503 = vadd.f32 0.0, %v502
    %v504 = vpop.f32.mrf.mxu0
    %505 = vmatprep.mubr.f32.mxu0 0.0
    %506 = vmatmul.mubr.f32.gmra.mxu0 %v412
    %v507 = vpop.f32.mrf.mxu0
    %v508 = vadd.f32 0.0, %v507
    %v509 = vpop.f32.mrf.mxu0
    %510 = vmatprep.mubr.f32.mxu0 0.0
    %511 = vmatmul.mubr.f32.gmra.mxu0 %v415
    %v512 = vpop.f32.mrf.mxu0
    %v513 = vadd.f32 0.0, %v512
    %v514 = vpop.f32.mrf.mxu0
    %515 = vmatprep.mubr.f32.mxu0 0.0
    %516 = vmatmul.mubr.f32.gmra.mxu0 %v418
    %v517 = vpop.f32.mrf.mxu0
    %v518 = vadd.f32 0.0, %v517
    %v519 = vpop.f32.mrf.mxu0
    %520 = vmatprep.mubr.f32.mxu0 0.0
    %521 = vmatmul.mubr.f32.gmra.mxu0 %v421
    %v522 = vpop.f32.mrf.mxu0
    %v523 = vadd.f32 0.0, %v522
    %v524 = vpop.f32.mrf.mxu0
    %525 = vmatprep.mubr.f32.mxu0 0.0
    %526 = vmatmul.mubr.f32.gmra.mxu0 %v424
    %v527 = vpop.f32.mrf.mxu0
    %v528 = vadd.f32 0.0, %v527
    %v529 = vpop.f32.mrf.mxu0
    %530 = vdwg.mxu0
    %v531 = vld [vmem:[#allocation7] sm:$0xff]
    %v532 = vld [vmem:[#allocation7 + $0x8] sm:$0xff]
    %v533 = vld [vmem:[#allocation7 + $0x10] sm:$0xff]
    %v534 = vld [vmem:[#allocation7 + $0x18] sm:$0xff]
    %v535 = vpack.c.bf16 %v532, %v531
    %v536 = vpack.c.bf16 %v534, %v533
    %v538 = vsel %vm401, 0, 0
    %540 = vmatprep.subr.bf16.mxu0 0
    %541 = vmatpush1.bf16.msra.mxu0 0
    %542 = vmatprep.subr.bf16.mxu0 0
    %543 = vmatpush1.bf16.msra.mxu0 0
    %544 = vmatprep.subr.bf16.mxu0 0
    %545 = vmatpush1.bf16.msra.mxu0 0
    %546 = vmatprep.subr.bf16.mxu0 0
    %547 = vmatpush1.bf16.msra.mxu0 0
    %548 = vmatprep.subr.bf16.mxu0 0
    %549 = vmatpush1.bf16.msra.mxu0 0
    %550 = vmatprep.subr.bf16.mxu0 0
    %551 = vmatpush1.bf16.msra.mxu0 0
    %552 = vmatprep.subr.bf16.mxu0 0
    %553 = vmatpush1.bf16.msra.mxu0 %v536
    %554 = vmatprep.subr.bf16.mxu0 0
    %555 = vmatpush1.bf16.msra.mxu0 %v535
    %556 = vmatprep.subr.bf16.mxu0 0
    %557 = vmatpush2.bf16.msra.mxu0 0
    %558 = vmatprep.subr.bf16.mxu0 0
    %559 = vmatpush2.bf16.msra.mxu0 0
    %560 = vmatprep.subr.bf16.mxu0 0
    %561 = vmatpush2.bf16.msra.mxu0 0
    %562 = vmatprep.subr.bf16.mxu0 0
    %563 = vmatpush2.bf16.msra.mxu0 0
    %564 = vmatprep.subr.bf16.mxu0 0
    %565 = vmatpush2.bf16.msra.mxu0 0
    %566 = vmatprep.subr.bf16.mxu0 0
    %567 = vmatpush2.bf16.msra.mxu0 0
    %568 = vmatprep.subr.bf16.mxu0 0
    %569 = vmatpush2.bf16.msra.mxu0 0
    %570 = vmatprep.subr.bf16.mxu0 0
    %571 = vmatpush2.bf16.msra.mxu0 0
    %572 = vmatprep.mubr.bf16.mxu0 0
    %573 = vmatmul.mubr.bf16.gmra.mxu0 %v538
    %v574 = vpop.f32.mrf.mxu0
    %v575 = vadd.f32 %v493, %v574
    %v576 = vpop.f32.mrf.mxu0
    %v577 = vpop.f32.mrf.mxu0
    %v578 = vpop.f32.mrf.mxu0
    %579 = vdwg.mxu0
    %v580 = vxor.u32 %v575, 2147483648
    %v581 = vmul.f32 %v580, 1.442695
    %v582 = vpow.pop %v581
    %v583 = vadd.f32 %v582, 1.0
    %v584 = vrcp.pop %v583
    %v585 = vmul.f32 1.0, %v584
    %v586 = vtanh.pop %v575
    %v587 = vmul.f32 %v585, 0.0
    %589 = vrot.lane.b32.xlu0 %v586, 64
    %v590 = vpop.permute.xlu0 %589
    %v592 = vmul.f32 %v585, %v590
    %594 = vrot.lane.b32.xlu0 %v592, 32
    %v595 = vpop.permute.xlu0 %594
    %v597 = vadd.f32 %v587, %v595
    %v598 = vtanh.pop %v597
    %600 = vrot.lane.b32.xlu0 %v598, 64
    %v601 = vpop.permute.xlu0 %600
    %v603 = vmul.f32 %v585, %v601
    %v604 = vpack.c.bf16 %v603, %v603
    %606 = vrot.lane.b32.xlu0 %v604, 32
    %v607 = vpop.permute.xlu0 %606
    %v609 = vsel %vm401, %v607, 0
    %611 = vmatprep.subr.bf16.mxu0 0
    %612 = vmatpush1.bf16.msra.mxu0 0
    %613 = vmatprep.subr.bf16.mxu0 0
    %614 = vmatpush1.bf16.msra.mxu0 0
    %615 = vmatprep.subr.bf16.mxu0 0
    %616 = vmatpush1.bf16.msra.mxu0 0
    %617 = vmatprep.subr.bf16.mxu0 0
    %618 = vmatpush1.bf16.msra.mxu0 0
    %619 = vmatprep.subr.bf16.mxu0 0
    %620 = vmatpush1.bf16.msra.mxu0 0
    %621 = vmatprep.subr.bf16.mxu0 0
    %622 = vmatpush1.bf16.msra.mxu0 0
    %623 = vmatprep.subr.bf16.mxu0 0
    %624 = vmatpush1.bf16.msra.mxu0 %v536
    %625 = vmatprep.subr.bf16.mxu0 0
    %626 = vmatpush1.bf16.msra.mxu0 %v535
    %627 = vmatprep.subr.bf16.mxu0 0
    %628 = vmatpush2.bf16.msra.mxu0 0
    %629 = vmatprep.subr.bf16.mxu0 0
    %630 = vmatpush2.bf16.msra.mxu0 0
    %631 = vmatprep.subr.bf16.mxu0 0
    %632 = vmatpush2.bf16.msra.mxu0 0
    %633 = vmatprep.subr.bf16.mxu0 0
    %634 = vmatpush2.bf16.msra.mxu0 0
    %635 = vmatprep.subr.bf16.mxu0 0
    %636 = vmatpush2.bf16.msra.mxu0 0
    %637 = vmatprep.subr.bf16.mxu0 0
    %638 = vmatpush2.bf16.msra.mxu0 0
    %639 = vmatprep.subr.bf16.mxu0 0
    %640 = vmatpush2.bf16.msra.mxu0 0
    %641 = vmatprep.subr.bf16.mxu0 0
    %642 = vmatpush2.bf16.msra.mxu0 0
    %643 = vmatprep.mubr.bf16.mxu0 0
    %644 = vmatmul.mubr.bf16.gmra.mxu0 %v609
    %v645 = vpop.f32.mrf.mxu0
    %v646 = vadd.f32 %v498, %v645
    %v647 = vpop.f32.mrf.mxu0
    %v648 = vpop.f32.mrf.mxu0
    %v649 = vpop.f32.mrf.mxu0
    %650 = vdwg.mxu0
    %v651 = vxor.u32 %v646, 2147483648
    %v652 = vmul.f32 %v651, 1.442695
    %v653 = vpow.pop %v652
    %v654 = vadd.f32 %v653, 1.0
    %v655 = vrcp.pop %v654
    %v656 = vmul.f32 1.0, %v655
    %v657 = vtanh.pop %v646
    %v658 = vmul.f32 %v656, %v597
    %660 = vrot.lane.b32.xlu0 %v657, 64
    %v661 = vpop.permute.xlu0 %660
    %v663 = vmul.f32 %v656, %v661
    %665 = vrot.lane.b32.xlu0 %v663, 32
    %v666 = vpop.permute.xlu0 %665
    %v668 = vadd.f32 %v658, %v666
    %v669 = vtanh.pop %v668
    %671 = vrot.lane.b32.xlu0 %v669, 64
    %v672 = vpop.permute.xlu0 %671
    %v674 = vmul.f32 %v656, %v672
    %v675 = vpack.c.bf16 %v674, %v674
    %677 = vrot.lane.b32.xlu0 %v675, 32
    %v678 = vpop.permute.xlu0 %677
    %v680 = vsel %vm401, %v678, 0
    %682 = vmatprep.subr.bf16.mxu0 0
    %683 = vmatpush1.bf16.msra.mxu0 0
    %684 = vmatprep.subr.bf16.mxu0 0
    %685 = vmatpush1.bf16.msra.mxu0 0
    %686 = vmatprep.subr.bf16.mxu0 0
    %687 = vmatpush1.bf16.msra.mxu0 0
    %688 = vmatprep.subr.bf16.mxu0 0
    %689 = vmatpush1.bf16.msra.mxu0 0
    %690 = vmatprep.subr.bf16.mxu0 0
    %691 = vmatpush1.bf16.msra.mxu0 0
    %692 = vmatprep.subr.bf16.mxu0 0
    %693 = vmatpush1.bf16.msra.mxu0 0
    %694 = vmatprep.subr.bf16.mxu0 0
    %695 = vmatpush1.bf16.msra.mxu0 %v536
    %696 = vmatprep.subr.bf16.mxu0 0
    %697 = vmatpush1.bf16.msra.mxu0 %v535
    %698 = vmatprep.subr.bf16.mxu0 0
    %699 = vmatpush2.bf16.msra.mxu0 0
    %700 = vmatprep.subr.bf16.mxu0 0
    %701 = vmatpush2.bf16.msra.mxu0 0
    %702 = vmatprep.subr.bf16.mxu0 0
    %703 = vmatpush2.bf16.msra.mxu0 0
    %704 = vmatprep.subr.bf16.mxu0 0
    %705 = vmatpush2.bf16.msra.mxu0 0
    %706 = vmatprep.subr.bf16.mxu0 0
    %707 = vmatpush2.bf16.msra.mxu0 0
    %708 = vmatprep.subr.bf16.mxu0 0
    %709 = vmatpush2.bf16.msra.mxu0 0
    %710 = vmatprep.subr.bf16.mxu0 0
    %711 = vmatpush2.bf16.msra.mxu0 0
    %712 = vmatprep.subr.bf16.mxu0 0
    %713 = vmatpush2.bf16.msra.mxu0 0
    %714 = vmatprep.mubr.bf16.mxu0 0
    %715 = vmatmul.mubr.bf16.gmra.mxu0 %v680
    %v716 = vpop.f32.mrf.mxu0
    %v717 = vadd.f32 %v503, %v716
    %v718 = vpop.f32.mrf.mxu0
    %v719 = vpop.f32.mrf.mxu0
    %v720 = vpop.f32.mrf.mxu0
    %721 = vdwg.mxu0
    %v722 = vxor.u32 %v717, 2147483648
    %v723 = vmul.f32 %v722, 1.442695
    %v724 = vpow.pop %v723
    %v725 = vadd.f32 %v724, 1.0
    %v726 = vrcp.pop %v725
    %v727 = vmul.f32 1.0, %v726
    %v728 = vtanh.pop %v717
    %v729 = vmul.f32 %v727, %v668
    %731 = vrot.lane.b32.xlu0 %v728, 64
    %v732 = vpop.permute.xlu0 %731
    %v734 = vmul.f32 %v727, %v732
    %736 = vrot.lane.b32.xlu0 %v734, 32
    %v737 = vpop.permute.xlu0 %736
    %v739 = vadd.f32 %v729, %v737
    %v740 = vtanh.pop %v739
    %742 = vrot.lane.b32.xlu0 %v740, 64
    %v743 = vpop.permute.xlu0 %742
    %v745 = vmul.f32 %v727, %v743
    %v746 = vpack.c.bf16 %v745, %v745
    %748 = vrot.lane.b32.xlu0 %v746, 32
    %v749 = vpop.permute.xlu0 %748
    %v751 = vsel %vm401, %v749, 0
    %753 = vmatprep.subr.bf16.mxu0 0
    %754 = vmatpush1.bf16.msra.mxu0 0
    %755 = vmatprep.subr.bf16.mxu0 0
    %756 = vmatpush1.bf16.msra.mxu0 0
    %757 = vmatprep.subr.bf16.mxu0 0
    %758 = vmatpush1.bf16.msra.mxu0 0
    %759 = vmatprep.subr.bf16.mxu0 0
    %760 = vmatpush1.bf16.msra.mxu0 0
    %761 = vmatprep.subr.bf16.mxu0 0
    %762 = vmatpush1.bf16.msra.mxu0 0
    %763 = vmatprep.subr.bf16.mxu0 0
    %764 = vmatpush1.bf16.msra.mxu0 0
    %765 = vmatprep.subr.bf16.mxu0 0
    %766 = vmatpush1.bf16.msra.mxu0 %v536
    %767 = vmatprep.subr.bf16.mxu0 0
    %768 = vmatpush1.bf16.msra.mxu0 %v535
    %769 = vmatprep.subr.bf16.mxu0 0
    %770 = vmatpush2.bf16.msra.mxu0 0
    %771 = vmatprep.subr.bf16.mxu0 0
    %772 = vmatpush2.bf16.msra.mxu0 0
    %773 = vmatprep.subr.bf16.mxu0 0
    %774 = vmatpush2.bf16.msra.mxu0 0
    %775 = vmatprep.subr.bf16.mxu0 0
    %776 = vmatpush2.bf16.msra.mxu0 0
    %777 = vmatprep.subr.bf16.mxu0 0
    %778 = vmatpush2.bf16.msra.mxu0 0
    %779 = vmatprep.subr.bf16.mxu0 0
    %780 = vmatpush2.bf16.msra.mxu0 0
    %781 = vmatprep.subr.bf16.mxu0 0
    %782 = vmatpush2.bf16.msra.mxu0 0
    %783 = vmatprep.subr.bf16.mxu0 0
    %784 = vmatpush2.bf16.msra.mxu0 0
    %785 = vmatprep.mubr.bf16.mxu0 0
    %786 = vmatmul.mubr.bf16.gmra.mxu0 %v751
    %v787 = vpop.f32.mrf.mxu0
    %v788 = vadd.f32 %v508, %v787
    %v789 = vpop.f32.mrf.mxu0
    %v790 = vpop.f32.mrf.mxu0
    %v791 = vpop.f32.mrf.mxu0
    %792 = vdwg.mxu0
    %v793 = vxor.u32 %v788, 2147483648
    %v794 = vmul.f32 %v793, 1.442695
    %v795 = vpow.pop %v794
    %v796 = vadd.f32 %v795, 1.0
    %v797 = vrcp.pop %v796
    %v798 = vmul.f32 1.0, %v797
    %v799 = vtanh.pop %v788
    %v800 = vmul.f32 %v798, %v739
    %802 = vrot.lane.b32.xlu0 %v799, 64
    %v803 = vpop.permute.xlu0 %802
    %v805 = vmul.f32 %v798, %v803
    %807 = vrot.lane.b32.xlu0 %v805, 32
    %v808 = vpop.permute.xlu0 %807
    %v810 = vadd.f32 %v800, %v808
    %v811 = vtanh.pop %v810
    %813 = vrot.lane.b32.xlu0 %v811, 64
    %v814 = vpop.permute.xlu0 %813
    %v816 = vmul.f32 %v798, %v814
    %v817 = vpack.c.bf16 %v816, %v816
    %819 = vrot.lane.b32.xlu0 %v817, 32
    %v820 = vpop.permute.xlu0 %819
    %v822 = vsel %vm401, %v820, 0
    %824 = vmatprep.subr.bf16.mxu0 0
    %825 = vmatpush1.bf16.msra.mxu0 0
    %826 = vmatprep.subr.bf16.mxu0 0
    %827 = vmatpush1.bf16.msra.mxu0 0
    %828 = vmatprep.subr.bf16.mxu0 0
    %829 = vmatpush1.bf16.msra.mxu0 0
    %830 = vmatprep.subr.bf16.mxu0 0
    %831 = vmatpush1.bf16.msra.mxu0 0
    %832 = vmatprep.subr.bf16.mxu0 0
    %833 = vmatpush1.bf16.msra.mxu0 0
    %834 = vmatprep.subr.bf16.mxu0 0
    %835 = vmatpush1.bf16.msra.mxu0 0
    %836 = vmatprep.subr.bf16.mxu0 0
    %837 = vmatpush1.bf16.msra.mxu0 %v536
    %838 = vmatprep.subr.bf16.mxu0 0
    %839 = vmatpush1.bf16.msra.mxu0 %v535
    %840 = vmatprep.subr.bf16.mxu0 0
    %841 = vmatpush2.bf16.msra.mxu0 0
    %842 = vmatprep.subr.bf16.mxu0 0
    %843 = vmatpush2.bf16.msra.mxu0 0
    %844 = vmatprep.subr.bf16.mxu0 0
    %845 = vmatpush2.bf16.msra.mxu0 0
    %846 = vmatprep.subr.bf16.mxu0 0
    %847 = vmatpush2.bf16.msra.mxu0 0
    %848 = vmatprep.subr.bf16.mxu0 0
    %849 = vmatpush2.bf16.msra.mxu0 0
    %850 = vmatprep.subr.bf16.mxu0 0
    %851 = vmatpush2.bf16.msra.mxu0 0
    %852 = vmatprep.subr.bf16.mxu0 0
    %853 = vmatpush2.bf16.msra.mxu0 0
    %854 = vmatprep.subr.bf16.mxu0 0
    %855 = vmatpush2.bf16.msra.mxu0 0
    %856 = vmatprep.mubr.bf16.mxu0 0
    %857 = vmatmul.mubr.bf16.gmra.mxu0 %v822
    %v858 = vpop.f32.mrf.mxu0
    %v859 = vadd.f32 %v513, %v858
    %v860 = vpop.f32.mrf.mxu0
    %v861 = vpop.f32.mrf.mxu0
    %v862 = vpop.f32.mrf.mxu0
    %863 = vdwg.mxu0
    %v864 = vxor.u32 %v859, 2147483648
    %v865 = vmul.f32 %v864, 1.442695
    %v866 = vpow.pop %v865
    %v867 = vadd.f32 %v866, 1.0
    %v868 = vrcp.pop %v867
    %v869 = vmul.f32 1.0, %v868
    %v870 = vtanh.pop %v859
    %v871 = vmul.f32 %v869, %v810
    %873 = vrot.lane.b32.xlu0 %v870, 64
    %v874 = vpop.permute.xlu0 %873
    %v876 = vmul.f32 %v869, %v874
    %878 = vrot.lane.b32.xlu0 %v876, 32
    %v879 = vpop.permute.xlu0 %878
    %v881 = vadd.f32 %v871, %v879
    %v882 = vtanh.pop %v881
    %884 = vrot.lane.b32.xlu0 %v882, 64
    %v885 = vpop.permute.xlu0 %884
    %v887 = vmul.f32 %v869, %v885
    %v888 = vpack.c.bf16 %v887, %v887
    %890 = vrot.lane.b32.xlu0 %v888, 32
    %v891 = vpop.permute.xlu0 %890
    %v893 = vsel %vm401, %v891, 0
    %895 = vmatprep.subr.bf16.mxu0 0
    %896 = vmatpush1.bf16.msra.mxu0 0
    %897 = vmatprep.subr.bf16.mxu0 0
    %898 = vmatpush1.bf16.msra.mxu0 0
    %899 = vmatprep.subr.bf16.mxu0 0
    %900 = vmatpush1.bf16.msra.mxu0 0
    %901 = vmatprep.subr.bf16.mxu0 0
    %902 = vmatpush1.bf16.msra.mxu0 0
    %903 = vmatprep.subr.bf16.mxu0 0
    %904 = vmatpush1.bf16.msra.mxu0 0
    %905 = vmatprep.subr.bf16.mxu0 0
    %906 = vmatpush1.bf16.msra.mxu0 0
    %907 = vmatprep.subr.bf16.mxu0 0
    %908 = vmatpush1.bf16.msra.mxu0 %v536
    %909 = vmatprep.subr.bf16.mxu0 0
    %910 = vmatpush1.bf16.msra.mxu0 %v535
    %911 = vmatprep.subr.bf16.mxu0 0
    %912 = vmatpush2.bf16.msra.mxu0 0
    %913 = vmatprep.subr.bf16.mxu0 0
    %914 = vmatpush2.bf16.msra.mxu0 0
    %915 = vmatprep.subr.bf16.mxu0 0
    %916 = vmatpush2.bf16.msra.mxu0 0
    %917 = vmatprep.subr.bf16.mxu0 0
    %918 = vmatpush2.bf16.msra.mxu0 0
    %919 = vmatprep.subr.bf16.mxu0 0
    %920 = vmatpush2.bf16.msra.mxu0 0
    %921 = vmatprep.subr.bf16.mxu0 0
    %922 = vmatpush2.bf16.msra.mxu0 0
    %923 = vmatprep.subr.bf16.mxu0 0
    %924 = vmatpush2.bf16.msra.mxu0 0
    %925 = vmatprep.subr.bf16.mxu0 0
    %926 = vmatpush2.bf16.msra.mxu0 0
    %927 = vmatprep.mubr.bf16.mxu0 0
    %928 = vmatmul.mubr.bf16.gmra.mxu0 %v893
    %v929 = vpop.f32.mrf.mxu0
    %v930 = vadd.f32 %v518, %v929
    %v931 = vpop.f32.mrf.mxu0
    %v932 = vpop.f32.mrf.mxu0
    %v933 = vpop.f32.mrf.mxu0
    %934 = vdwg.mxu0
    %v935 = vxor.u32 %v930, 2147483648
    %v936 = vmul.f32 %v935, 1.442695
    %v937 = vpow.pop %v936
    %v938 = vadd.f32 %v937, 1.0
    %v939 = vrcp.pop %v938
    %v940 = vmul.f32 1.0, %v939
    %v941 = vtanh.pop %v930
    %v942 = vmul.f32 %v940, %v881
    %944 = vrot.lane.b32.xlu0 %v941, 64
    %v945 = vpop.permute.xlu0 %944
    %v947 = vmul.f32 %v940, %v945
    %949 = vrot.lane.b32.xlu0 %v947, 32
    %v950 = vpop.permute.xlu0 %949
    %v952 = vadd.f32 %v942, %v950
    %v953 = vtanh.pop %v952
    %955 = vrot.lane.b32.xlu0 %v953, 64
    %v956 = vpop.permute.xlu0 %955
    %v958 = vmul.f32 %v940, %v956
    %v959 = vpack.c.bf16 %v958, %v958
    %961 = vrot.lane.b32.xlu0 %v959, 32
    %v962 = vpop.permute.xlu0 %961
    %v964 = vsel %vm401, %v962, 0
    %966 = vmatprep.subr.bf16.mxu0 0
    %967 = vmatpush1.bf16.msra.mxu0 0
    %968 = vmatprep.subr.bf16.mxu0 0
    %969 = vmatpush1.bf16.msra.mxu0 0
    %970 = vmatprep.subr.bf16.mxu0 0
    %971 = vmatpush1.bf16.msra.mxu0 0
    %972 = vmatprep.subr.bf16.mxu0 0
    %973 = vmatpush1.bf16.msra.mxu0 0
    %974 = vmatprep.subr.bf16.mxu0 0
    %975 = vmatpush1.bf16.msra.mxu0 0
    %976 = vmatprep.subr.bf16.mxu0 0
    %977 = vmatpush1.bf16.msra.mxu0 0
    %978 = vmatprep.subr.bf16.mxu0 0
    %979 = vmatpush1.bf16.msra.mxu0 %v536
    %980 = vmatprep.subr.bf16.mxu0 0
    %981 = vmatpush1.bf16.msra.mxu0 %v535
    %982 = vmatprep.subr.bf16.mxu0 0
    %983 = vmatpush2.bf16.msra.mxu0 0
    %984 = vmatprep.subr.bf16.mxu0 0
    %985 = vmatpush2.bf16.msra.mxu0 0
    %986 = vmatprep.subr.bf16.mxu0 0
    %987 = vmatpush2.bf16.msra.mxu0 0
    %988 = vmatprep.subr.bf16.mxu0 0
    %989 = vmatpush2.bf16.msra.mxu0 0
    %990 = vmatprep.subr.bf16.mxu0 0
    %991 = vmatpush2.bf16.msra.mxu0 0
    %992 = vmatprep.subr.bf16.mxu0 0
    %993 = vmatpush2.bf16.msra.mxu0 0
    %994 = vmatprep.subr.bf16.mxu0 0
    %995 = vmatpush2.bf16.msra.mxu0 0
    %996 = vmatprep.subr.bf16.mxu0 0
    %997 = vmatpush2.bf16.msra.mxu0 0
    %998 = vmatprep.mubr.bf16.mxu0 0
    %999 = vmatmul.mubr.bf16.gmra.mxu0 %v964
    %v1000 = vpop.f32.mrf.mxu0
    %v1001 = vadd.f32 %v523, %v1000
    %v1002 = vpop.f32.mrf.mxu0
    %v1003 = vpop.f32.mrf.mxu0
    %v1004 = vpop.f32.mrf.mxu0
    %1005 = vdwg.mxu0
    %v1006 = vxor.u32 %v1001, 2147483648
    %v1007 = vmul.f32 %v1006, 1.442695
    %v1008 = vpow.pop %v1007
    %v1009 = vadd.f32 %v1008, 1.0
    %v1010 = vrcp.pop %v1009
    %v1011 = vmul.f32 1.0, %v1010
    %v1012 = vtanh.pop %v1001
    %v1013 = vmul.f32 %v1011, %v952
    %1015 = vrot.lane.b32.xlu0 %v1012, 64
    %v1016 = vpop.permute.xlu0 %1015
    %v1018 = vmul.f32 %v1011, %v1016
    %1020 = vrot.lane.b32.xlu0 %v1018, 32
    %v1021 = vpop.permute.xlu0 %1020
    %v1023 = vadd.f32 %v1013, %v1021
    %v1024 = vtanh.pop %v1023
    %1026 = vrot.lane.b32.xlu0 %v1024, 64
    %v1027 = vpop.permute.xlu0 %1026
    %v1029 = vmul.f32 %v1011, %v1027
    %v1030 = vpack.c.bf16 %v1029, %v1029
    %1032 = vrot.lane.b32.xlu0 %v1030, 32
    %v1033 = vpop.permute.xlu0 %1032
    %v1035 = vsel %vm401, %v1033, 0
    %1037 = vmatprep.subr.bf16.mxu0 0
    %1038 = vmatpush1.bf16.msra.mxu0 0
    %1039 = vmatprep.subr.bf16.mxu0 0
    %1040 = vmatpush1.bf16.msra.mxu0 0
    %1041 = vmatprep.subr.bf16.mxu0 0
    %1042 = vmatpush1.bf16.msra.mxu0 0
    %1043 = vmatprep.subr.bf16.mxu0 0
    %1044 = vmatpush1.bf16.msra.mxu0 0
    %1045 = vmatprep.subr.bf16.mxu0 0
    %1046 = vmatpush1.bf16.msra.mxu0 0
    %1047 = vmatprep.subr.bf16.mxu0 0
    %1048 = vmatpush1.bf16.msra.mxu0 0
    %1049 = vmatprep.subr.bf16.mxu0 0
    %1050 = vmatpush1.bf16.msra.mxu0 %v536
    %1051 = vmatprep.subr.bf16.mxu0 0
    %1052 = vmatpush1.bf16.msra.mxu0 %v535
    %1053 = vmatprep.subr.bf16.mxu0 0
    %1054 = vmatpush2.bf16.msra.mxu0 0
    %1055 = vmatprep.subr.bf16.mxu0 0
    %1056 = vmatpush2.bf16.msra.mxu0 0
    %1057 = vmatprep.subr.bf16.mxu0 0
    %1058 = vmatpush2.bf16.msra.mxu0 0
    %1059 = vmatprep.subr.bf16.mxu0 0
    %1060 = vmatpush2.bf16.msra.mxu0 0
    %1061 = vmatprep.subr.bf16.mxu0 0
    %1062 = vmatpush2.bf16.msra.mxu0 0
    %1063 = vmatprep.subr.bf16.mxu0 0
    %1064 = vmatpush2.bf16.msra.mxu0 0
    %1065 = vmatprep.subr.bf16.mxu0 0
    %1066 = vmatpush2.bf16.msra.mxu0 0
    %1067 = vmatprep.subr.bf16.mxu0 0
    %1068 = vmatpush2.bf16.msra.mxu0 0
    %1069 = vmatprep.mubr.bf16.mxu0 0
    %1070 = vmatmul.mubr.bf16.gmra.mxu0 %v1035
    %v1071 = vpop.f32.mrf.mxu0
    %v1072 = vadd.f32 %v528, %v1071
    %v1073 = vpop.f32.mrf.mxu0
    %v1074 = vpop.f32.mrf.mxu0
    %v1075 = vpop.f32.mrf.mxu0
    %1076 = vdwg.mxu0
    %v1077 = vxor.u32 %v1072, 2147483648
    %v1078 = vmul.f32 %v1077, 1.442695
    %v1079 = vpow.pop %v1078
    %v1080 = vadd.f32 %v1079, 1.0
    %v1081 = vrcp.pop %v1080
    %v1082 = vmul.f32 1.0, %v1081
    %v1083 = vtanh.pop %v1072
    %v1084 = vmul.f32 %v1082, %v1023
    %1086 = vrot.lane.b32.xlu0 %v1083, 64
    %v1087 = vpop.permute.xlu0 %1086
    %v1089 = vmul.f32 %v1082, %v1087
    %1091 = vrot.lane.b32.xlu0 %v1089, 32
    %v1092 = vpop.permute.xlu0 %1091
    %v1094 = vadd.f32 %v1084, %v1092
    %v1095 = vtanh.pop %v1094
    %1097 = vrot.lane.b32.xlu0 %v1095, 64
    %v1098 = vpop.permute.xlu0 %1097
    %v1100 = vmul.f32 %v1082, %v1098
    %v1101 = vld [vmem:[#allocation9] sm:$0xff]
    %v1102 = vld [vmem:[#allocation9 + $0x8] sm:$0xff]
    %v1103 = vld [vmem:[#allocation9 + $0x10] sm:$0xff]
    %v1104 = vld [vmem:[#allocation9 + $0x18] sm:$0xff]
    %v1105 = vld [vmem:[%s4] sm:$0x1]
    %v1107 = vlaneseq
    %v1108 = vshrl.u32 %v1107, 7
    %v1109 = vsub.s32 0, %v1108
    %v1110 = vrot.slane %v1105, %v1109
    %1113 = vrot.lane.b32.xlu0 %v1100, 32
    %v1114 = vpop.permute.xlu0 %1113
    %v1115 = vsel %vm401, %v1114, 0
    %1117 = vmatprep.subr.mxu0 0.0
    %1118 = vmatpush1.msra.mxu0 0.0
    %1119 = vmatprep.subr.mxu0 0.0
    %1120 = vmatpush1.msra.mxu0 0.0
    %1121 = vmatprep.subr.mxu0 0.0
    %1122 = vmatpush1.msra.mxu0 0.0
    %1123 = vmatprep.subr.mxu0 0.0
    %1124 = vmatpush1.msra.mxu0 0.0
    %1125 = vmatprep.subr.mxu0 0.0
    %1126 = vmatpush1.msra.mxu0 0.0
    %1127 = vmatprep.subr.mxu0 0.0
    %1128 = vmatpush1.msra.mxu0 0.0
    %1129 = vmatprep.subr.mxu0 0.0
    %1130 = vmatpush1.msra.mxu0 0.0
    %1131 = vmatprep.subr.mxu0 0.0
    %1132 = vmatpush1.msra.mxu0 0.0
    %1133 = vmatprep.subr.mxu0 0.0
    %1134 = vmatpush1.msra.mxu0 0.0
    %1135 = vmatprep.subr.mxu0 0.0
    %1136 = vmatpush1.msra.mxu0 0.0
    %1137 = vmatprep.subr.mxu0 0.0
    %1138 = vmatpush1.msra.mxu0 0.0
    %1139 = vmatprep.subr.mxu0 0.0
    %1140 = vmatpush1.msra.mxu0 0.0
    %1141 = vmatprep.subr.mxu0 0.0
    %1142 = vmatpush1.msra.mxu0 %v1104
    %1143 = vmatprep.subr.mxu0 0.0
    %1144 = vmatpush1.msra.mxu0 %v1103
    %1145 = vmatprep.subr.mxu0 0.0
    %1146 = vmatpush1.msra.mxu0 %v1102
    %1147 = vmatprep.subr.mxu0 0.0
    %1148 = vmatpush1.msra.mxu0 %v1101
    %1149 = vmatprep.subr.mxu0 0.0
    %1150 = vmatpush2.msra.mxu0 0.0
    %1151 = vmatprep.subr.mxu0 0.0
    %1152 = vmatpush2.msra.mxu0 0.0
    %1153 = vmatprep.subr.mxu0 0.0
    %1154 = vmatpush2.msra.mxu0 0.0
    %1155 = vmatprep.subr.mxu0 0.0
    %1156 = vmatpush2.msra.mxu0 0.0
    %1157 = vmatprep.subr.mxu0 0.0
    %1158 = vmatpush2.msra.mxu0 0.0
    %1159 = vmatprep.subr.mxu0 0.0
    %1160 = vmatpush2.msra.mxu0 0.0
    %1161 = vmatprep.subr.mxu0 0.0
    %1162 = vmatpush2.msra.mxu0 0.0
    %1163 = vmatprep.subr.mxu0 0.0
    %1164 = vmatpush2.msra.mxu0 0.0
    %1165 = vmatprep.subr.mxu0 0.0
    %1166 = vmatpush2.msra.mxu0 0.0
    %1167 = vmatprep.subr.mxu0 0.0
    %1168 = vmatpush2.msra.mxu0 0.0
    %1169 = vmatprep.subr.mxu0 0.0
    %1170 = vmatpush2.msra.mxu0 0.0
    %1171 = vmatprep.subr.mxu0 0.0
    %1172 = vmatpush2.msra.mxu0 0.0
    %1173 = vmatprep.subr.mxu0 0.0
    %1174 = vmatpush2.msra.mxu0 0.0
    %1175 = vmatprep.subr.mxu0 0.0
    %1176 = vmatpush2.msra.mxu0 0.0
    %1177 = vmatprep.subr.mxu0 0.0
    %1178 = vmatpush2.msra.mxu0 0.0
    %1179 = vmatprep.subr.mxu0 0.0
    %1180 = vmatpush2.msra.mxu0 0.0
    %1181 = vmatprep.mubr.f32.mxu0 0.0
    %1182 = vmatmul.mubr.f32.gmra.mxu0 %v1115
    %v1183 = vpop.f32.mrf.mxu0
    %v1184 = vadd.f32 %v1110, %v1183
    %v1185 = vpop.f32.mrf.mxu0
    %1186 = vdwg.mxu0
    %1187 = vst [vmem:[#allocation10] sm:$0xff] %v1184
    // Predicated region
    $region38: #{tpu_custom_call.1} parent=1 // pred_check
      _
    $region39: #{tpu_custom_call.1} parent=1 // pred_check_branch
      %1189 = sbr.rel (0) target = $region41
    $region40: #{tpu_custom_call.1} parent=1 // pred_region
      %s1191 = ssub.s32 128, 128
      %1192 = vsyncadd [#allocation4], %s1191
      %s1194 = sshll.u32 [#allocation10], 4
      %s1195 = int_to_ptr.vmem [resolvable:$true] %s1194
      %1197 = dma.vmem_to_hbm [thread:$0]  %s1195, 128, %s5, [#allocation4]
    $region41: #{tpu_custom_call.1} parent=1 // pred_fallthru
      _
    // Predicated region
    $region42: #{tpu_custom_call.1} parent=1 // pred_check
      _
    $region43: #{tpu_custom_call.1} parent=1 // pred_check_branch
      %1199 = sbr.rel (0) target = $region45
    $region44: #{tpu_custom_call.1} parent=1 // pred_region
      %1200 = dma.done [#allocation4], 128
    $region45: #{tpu_custom_call.1} parent=1 // pred_fallthru
      _
    %1201 = vsyncpa [#allocation3], 1
    %1202 = vsyncpa [#allocation8], 1
    %1203 = vsyncpa [#allocation4], 1
    %1204 = vsyncpa [#allocation5], 1

</llo_original>
